<compile_context>
chip_gen: v7x
topology: tpu7x:2x2x1
jax: 0.10.0
libtpu: 0.0.40
codegen_flags: <defaults>
</compile_context>

<pallas_src>
import jax
import jax.numpy as jnp
from jax.experimental import pallas as pl
from jax.experimental.pallas import tpu as pltpu


def _round_up(x, m):
    return ((x + m - 1) // m) * m


def _pad_axis(a, target, axis):
    pad = target - a.shape[axis]
    if pad == 0:
        return a
    widths = [(0, 0)] * a.ndim
    widths[axis] = (0, pad)
    return jnp.pad(a, widths)


def _vmem_budget_bytes():
    """~80% of per-core VMEM (leaves Mosaic scratch/semaphore/pipeline headroom)."""
    cap = 64 * 1024 * 1024  # conservative fallback = v7x per-TC VMEM
    try:
        info = pltpu.get_tpu_info()
        cap = int(getattr(info, "vmem_capacity_bytes", cap))
    except Exception:
        pass
    return int(cap * 0.8)


def _choose_tiles(n_rows, dim_pad, hid_pad, x_bytes, out_bytes, row_align, budget):
    """Pick (tm, th): row tile and hidden tile.

    Prefers keeping the full hidden width resident (weights DMA'd once,
    single-buffered) with the largest row tile that fits the budget; falls back to
    tiling the hidden (reduction) dim when the weights alone would not fit VMEM.
    """
    headroom = 2 * 1024 * 1024  # Mosaic internal scratch / bookkeeping
    n_rounded = _round_up(max(n_rows, row_align), row_align)

    h_units = hid_pad // 128
    th_cands = sorted({128 * d for d in range(1, h_units + 1) if h_units % d == 0},
                      reverse=True)

    tm_cands = []
    for t in (1024, 512, 256, 128, 64, 32, 16, 8):
        t = min(_round_up(t, row_align), n_rounded)
        if t not in tm_cands:
            tm_cands.append(t)
    tm_cands.sort(reverse=True)

    best = None
    for th in th_cands:
        nh = hid_pad // th
        w_mult = 1 if nh == 1 else 2  # single-buffered only when index_map is constant
        resident = (w_mult * 3 * dim_pad * th * 2        # W_u, W_g, W_out (bf16)
                    + w_mult * 2 * th * 4                # b_u, b_g (f32)
                    + dim_pad * 4)                       # b_out (f32, constant)
        if resident + headroom > budget:
            continue
        for tm in tm_cands:
            act = (2 * tm * dim_pad * x_bytes            # double-buffered x tile
                   + 2 * tm * dim_pad * out_bytes        # double-buffered out tile
                   + tm * dim_pad * 2                    # normalized-x scratch (bf16)
                   + tm * dim_pad * 4                    # f32 accumulator scratch
                   + 4 * tm * th * 4)                    # live f32 intermediates
            if resident + act + headroom <= budget:
                if best is None or tm > best[0]:
                    best = (tm, th)
                if tm >= min(256, n_rounded):
                    return tm, th
                break  # largest tm for this th found; try a narrower th
    if best is not None:
        return best
    return row_align, 128


def _ff_kernel(x_ref, wu_ref, wg_ref, bu_ref, bg_ref, wo_ref, bo_ref, o_ref,
               xn_ref, acc_ref):
    h = pl.program_id(1)

    @pl.when(h == 0)
    def _():
        # RMSNorm: gamma * sqrt(dim) is folded into W_u / W_g rows in the wrapper,
        # so only the 1/||x|| scaling happens here. Padded columns of x are zero so
        # the sum-of-squares is unaffected by padding.
        x = x_ref[...].astype(jnp.float32)
        sumsq = jnp.sum(x * x, axis=-1, keepdims=True)
        inv = jax.lax.rsqrt(jnp.maximum(sumsq, 1e-24))   # == 1 / max(||x||, 1e-12)
        xn_ref[...] = (x * inv).astype(jnp.bfloat16)
        acc_ref[...] = jnp.zeros_like(acc_ref)

    # proj_in split into the "u" half and the "gates" half: both matmul outputs are
    # lane-dense (no slicing of the hidden dim). bf16 MXU operands, f32 accumulation.
    xb = xn_ref[...]
    u = jnp.dot(xb, wu_ref[...], preferred_element_type=jnp.float32) + bu_ref[...]
    gates = jnp.dot(xb, wg_ref[...], preferred_element_type=jnp.float32) + bg_ref[...]

    # GEGLU (f32 elementwise); tanh GELU keeps the transcendental on the EUP slot.
    # Dropout(p=0.0) is the identity.
    g = jax.nn.gelu(gates, approximate=True) * u

    # proj_out partial product accumulated across the hidden-dim grid axis.
    acc_ref[...] += jnp.dot(g.astype(jnp.bfloat16), wo_ref[...],
                            preferred_element_type=jnp.float32)

    @pl.when(h == pl.num_programs(1) - 1)
    def _():
        o_ref[...] = (acc_ref[...] + bo_ref[...]).astype(o_ref.dtype)


def feed_forward(x, gamma, w_in, b_in, w_out, b_out):
    """x: (batch, seq, dim). w_in: (dim, 2*dim_inner) == proj_in.weight.T,
    w_out: (dim_inner, dim) == proj_out.weight.T. Returns (batch, seq, dim)."""
    batch, seq, dim = x.shape
    dim_inner = w_out.shape[0]
    n = batch * seq

    dim_pad = _round_up(dim, 128)
    hid_pad = _round_up(dim_inner, 128)

    x_bytes = jnp.dtype(x.dtype).itemsize
    out_bytes = x_bytes
    row_align = max(8, 32 // max(1, x_bytes))   # sublane packing for narrow dtypes

    budget = _vmem_budget_bytes()
    tm, th = _choose_tiles(n, dim_pad, hid_pad, x_bytes, out_bytes, row_align, budget)

    # Keep >= 2 row-grid steps when possible so "parallel" can shard across the
    # two TensorCores on v7x (neutral on single-TC v5e/v6e).
    n_rounded = _round_up(max(n, row_align), row_align)
    if tm >= n_rounded and n_rounded > row_align:
        tm = _round_up(max(row_align, n_rounded // 2), row_align)

    n_pad = _round_up(n, tm)
    nh = hid_pad // th

    # ---- wrapper-side layout (x kept in its native dtype; all pads are zeros) ----
    x2 = _pad_axis(_pad_axis(x.reshape(n, dim), dim_pad, 1), n_pad, 0)

    # Fold gamma * sqrt(dim) into the rows of proj_in (in f32, before the single
    # bf16 cast), then split into the "u" and "gates" halves.
    scale = gamma.astype(jnp.float32) * (dim ** 0.5)
    w_in_s = w_in.astype(jnp.float32) * scale[:, None]
    w_u = _pad_axis(_pad_axis(w_in_s[:, :dim_inner], dim_pad, 0), hid_pad, 1)
    w_g = _pad_axis(_pad_axis(w_in_s[:, dim_inner:], dim_pad, 0), hid_pad, 1)
    w_u = w_u.astype(jnp.bfloat16)
    w_g = w_g.astype(jnp.bfloat16)
    b_u = _pad_axis(b_in[:dim_inner].reshape(1, dim_inner).astype(jnp.float32),
                    hid_pad, 1)
    b_g = _pad_axis(b_in[dim_inner:].reshape(1, dim_inner).astype(jnp.float32),
                    hid_pad, 1)
    w_o = _pad_axis(_pad_axis(w_out.astype(jnp.float32), hid_pad, 0),
                    dim_pad, 1).astype(jnp.bfloat16)
    b_o = _pad_axis(b_out.reshape(1, dim).astype(jnp.float32), dim_pad, 1)

    def build_call(single_buffer):
        def spec(shape, imap, constant=False):
            if single_buffer and constant:
                # Constant-index inputs are DMA'd once; single-buffer them so the
                # resident weights don't occupy 2x VMEM.
                return pl.BlockSpec(shape, imap, pipeline_mode=pl.Buffered(1))
            return pl.BlockSpec(shape, imap)

        const_w = (nh == 1)  # weight/bias index maps constant only when nh == 1
        in_specs = [
            pl.BlockSpec((tm, dim_pad), lambda i, h: (i, 0)),      # x (pipelined)
            spec((dim_pad, th), lambda i, h: (0, h), const_w),     # W_u
            spec((dim_pad, th), lambda i, h: (0, h), const_w),     # W_gate
            spec((1, th), lambda i, h: (0, h), const_w),           # b_u
            spec((1, th), lambda i, h: (0, h), const_w),           # b_gate
            spec((th, dim_pad), lambda i, h: (h, 0), const_w),     # W_out
            spec((1, dim_pad), lambda i, h: (0, 0), True),         # b_out
        ]
        out_spec = pl.BlockSpec((tm, dim_pad), lambda i, h: (i, 0))  # lane-dense

        return pl.pallas_call(
            _ff_kernel,
            out_shape=jax.ShapeDtypeStruct((n_pad, dim_pad), x.dtype),
            grid_spec=pltpu.PrefetchScalarGridSpec(
                num_scalar_prefetch=0,
                grid=(n_pad // tm, nh),
                in_specs=in_specs,
                out_specs=out_spec,
                scratch_shapes=[
                    pltpu.VMEM((tm, dim_pad), jnp.bfloat16),   # normalized x
                    pltpu.VMEM((tm, dim_pad), jnp.float32),    # proj_out accumulator
                ]),
            compiler_params=pltpu.CompilerParams(
                dimension_semantics=("parallel", "arbitrary"),
                vmem_limit_bytes=budget),
        )

    args = (x2, w_u, w_g, b_u, b_g, w_o, b_o)
    try:
        out = build_call(True)(*args)
    except Exception:
        # Fallback if this Pallas build rejects Buffered(1): default double-buffering.
        out = build_call(False)(*args)

    return out[:n, :dim].reshape(batch, seq, dim)


def _reference(x, gamma, w_in, b_in, w_out, b_out):
    dim = x.shape[-1]
    dim_inner = w_out.shape[0]
    xf = x.astype(jnp.float32)
    l2 = jnp.sqrt(jnp.sum(xf * xf, axis=-1, keepdims=True))
    xf = xf / jnp.maximum(l2, 1e-12) * (dim ** 0.5) * gamma
    h = xf @ w_in + b_in
    u, gates = h[..., :dim_inner], h[..., dim_inner:]
    g = jax.nn.gelu(gates, approximate=False) * u   # torch F.gelu default = exact erf
    return (g @ w_out + b_out).astype(x.dtype)


if __name__ == "__main__":
    # FeedForward(dim=48, mult=4): dim_inner = int(4*48*2/3) = 128
    batch, seq, dim, mult = 2, 8, 48, 4
    dim_inner = int(mult * dim * 2 / 3)

    key = jax.random.PRNGKey(0)
    kx, kwi, kbi, kwo, kbo = jax.random.split(key, 5)

    x = jax.random.normal(kx, (batch, seq, dim), dtype=jnp.float32)

    # Deterministic parameter init (torch.nn.Linear-like uniform scaling).
    gamma = jnp.ones((dim,), dtype=jnp.float32)                       # RMSNorm.gamma
    lim_in = 1.0 / (dim ** 0.5)
    w_in = jax.random.uniform(kwi, (dim, 2 * dim_inner), jnp.float32,
                              minval=-lim_in, maxval=lim_in)          # proj_in.weight.T
    b_in = jax.random.uniform(kbi, (2 * dim_inner,), jnp.float32,
                              minval=-lim_in, maxval=lim_in)
    lim_out = 1.0 / (dim_inner ** 0.5)
    w_out = jax.random.uniform(kwo, (dim_inner, dim), jnp.float32,
                               minval=-lim_out, maxval=lim_out)       # proj_out.weight.T
    b_out = jax.random.uniform(kbo, (dim,), jnp.float32,
                               minval=-lim_out, maxval=lim_out)

    out = feed_forward(x, gamma, w_in, b_in, w_out, b_out)
    out = jax.block_until_ready(out)

    ref = _reference(x, gamma, w_in, b_in, w_out, b_out)
    assert out.shape == (batch, seq, dim)
    # bf16 MXU operands (f32 accumulation) + tanh GELU -> loosened tolerance.
    assert jnp.allclose(out, ref, atol=2e-2, rtol=2e-2), "mismatch vs reference"

    print("KERNEL_OK")
</pallas_src>

<mosaic_0001>
module attributes {stable_mosaic.version = 11 : i64} {
  func.func @_ff_kernel(%arg0: i32, %arg1: i32, %arg2: memref<8x128xf32, #tpu.memory_space<vmem>>, %arg3: memref<128x128xbf16, #tpu.memory_space<vmem>>, %arg4: memref<128x128xbf16, #tpu.memory_space<vmem>>, %arg5: memref<1x128xf32, #tpu.memory_space<vmem>>, %arg6: memref<1x128xf32, #tpu.memory_space<vmem>>, %arg7: memref<128x128xbf16, #tpu.memory_space<vmem>>, %arg8: memref<1x128xf32, #tpu.memory_space<vmem>>, %arg9: memref<8x128xf32, #tpu.memory_space<vmem>>, %arg10: memref<8x128xbf16, #tpu.memory_space<vmem>>, %arg11: memref<8x128xf32, #tpu.memory_space<vmem>>) attributes {dimension_semantics = [#tpu.dimension_semantics<parallel>, #tpu.dimension_semantics<arbitrary>], iteration_bounds = array<i64: 2, 1>, scalar_prefetch = 0 : i64, scratch_operands = 2 : i64, tpu.core_type = #tpu.core_type<tc>, window_params = [{transform_indices = @transform_0, window_bounds = array<i64: 8, 128>}, {pipeline_mode = #tpu.pipeline_mode<synchronous>, transform_indices = @transform_1, window_bounds = array<i64: 128, 128>}, {pipeline_mode = #tpu.pipeline_mode<synchronous>, transform_indices = @transform_2, window_bounds = array<i64: 128, 128>}, {pipeline_mode = #tpu.pipeline_mode<synchronous>, transform_indices = @transform_3, window_bounds = array<i64: 1, 128>}, {pipeline_mode = #tpu.pipeline_mode<synchronous>, transform_indices = @transform_4, window_bounds = array<i64: 1, 128>}, {pipeline_mode = #tpu.pipeline_mode<synchronous>, transform_indices = @transform_5, window_bounds = array<i64: 128, 128>}, {pipeline_mode = #tpu.pipeline_mode<synchronous>, transform_indices = @transform_6, window_bounds = array<i64: 1, 128>}, {transform_indices = @transform_7, window_bounds = array<i64: 8, 128>}]} {
    %c0_i32 = arith.constant 0 : i32
    %0 = arith.cmpi eq, %arg1, %c0_i32 : i32
    %1 = arith.extui %0 : i1 to i32
    %c0_i32_0 = arith.constant 0 : i32
    %2 = arith.cmpi ne, %1, %c0_i32_0 : i32
    scf.if %2 {
      %c0_24 = arith.constant 0 : index
      %c0_25 = arith.constant 0 : index
      %37 = vector.load %arg2[%c0_24, %c0_25] : memref<8x128xf32, #tpu.memory_space<vmem>>, vector<8x128xf32>
      %38 = arith.mulf %37, %37 : vector<8x128xf32>
      %cst_26 = arith.constant dense<0.000000e+00> : vector<8xf32>
      %39 = vector.multi_reduction <add>, %38, %cst_26 [1] : vector<8x128xf32> to vector<8xf32>
      %40 = vector.shape_cast %39 : vector<8xf32> to vector<8x1xf32>
      %cst_27 = arith.constant 1.000000e-24 : f32
      %41 = vector.broadcast %cst_27 : f32 to vector<8x1xf32>
      %42 = arith.maximumf %40, %41 : vector<8x1xf32>
      %43 = math.rsqrt %42 : vector<8x1xf32>
      %44 = vector.broadcast %43 : vector<8x1xf32> to vector<8x128xf32>
      %45 = arith.mulf %37, %44 : vector<8x128xf32>
      %46 = arith.truncf %45 : vector<8x128xf32> to vector<8x128xbf16>
      %c0_28 = arith.constant 0 : index
      %c0_29 = arith.constant 0 : index
      %47 = vector.load %arg10[%c0_28, %c0_29] : memref<8x128xbf16, #tpu.memory_space<vmem>>, vector<8x128xbf16>
      tpu.vector_store %arg10[%c0_28, %c0_29], %46 {strides = array<i32>} : memref<8x128xbf16, #tpu.memory_space<vmem>>, vector<8x128xbf16>,
      %cst_30 = arith.constant 0.000000e+00 : f32
      %48 = vector.broadcast %cst_30 : f32 to vector<8x128xf32>
      %c0_31 = arith.constant 0 : index
      %c0_32 = arith.constant 0 : index
      %49 = vector.load %arg11[%c0_31, %c0_32] : memref<8x128xf32, #tpu.memory_space<vmem>>, vector<8x128xf32>
      tpu.vector_store %arg11[%c0_31, %c0_32], %48 {strides = array<i32>} : memref<8x128xf32, #tpu.memory_space<vmem>>, vector<8x128xf32>,
    } else {
    }
    %c0 = arith.constant 0 : index
    %c0_1 = arith.constant 0 : index
    %3 = vector.load %arg10[%c0, %c0_1] : memref<8x128xbf16, #tpu.memory_space<vmem>>, vector<8x128xbf16>
    %c0_2 = arith.constant 0 : index
    %c0_3 = arith.constant 0 : index
    %4 = vector.load %arg3[%c0_2, %c0_3] : memref<128x128xbf16, #tpu.memory_space<vmem>>, vector<128x128xbf16>
    %cst = arith.constant dense<0.000000e+00> : vector<8x128xf32>
    %5 = tpu.matmul %3, %4, %cst {dimension_numbers = #tpu.dot_dimension_numbers<[1], [0], [0], [1], [0, 0, 1, 1], [], []>} : vector<8x128xbf16>, vector<128x128xbf16>, vector<8x128xf32> -> vector<8x128xf32>
    %c0_4 = arith.constant 0 : index
    %c0_5 = arith.constant 0 : index
    %6 = vector.load %arg5[%c0_4, %c0_5] : memref<1x128xf32, #tpu.memory_space<vmem>>, vector<1x128xf32>
    %7 = vector.broadcast %6 : vector<1x128xf32> to vector<8x128xf32>
    %8 = arith.addf %5, %7 : vector<8x128xf32>
    %c0_6 = arith.constant 0 : index
    %c0_7 = arith.constant 0 : index
    %9 = vector.load %arg4[%c0_6, %c0_7] : memref<128x128xbf16, #tpu.memory_space<vmem>>, vector<128x128xbf16>
    %cst_8 = arith.constant dense<0.000000e+00> : vector<8x128xf32>
    %10 = tpu.matmul %3, %9, %cst_8 {dimension_numbers = #tpu.dot_dimension_numbers<[1], [0], [0], [1], [0, 0, 1, 1], [], []>} : vector<8x128xbf16>, vector<128x128xbf16>, vector<8x128xf32> -> vector<8x128xf32>
    %c0_9 = arith.constant 0 : index
    %c0_10 = arith.constant 0 : index
    %11 = vector.load %arg6[%c0_9, %c0_10] : memref<1x128xf32, #tpu.memory_space<vmem>>, vector<1x128xf32>
    %12 = vector.broadcast %11 : vector<1x128xf32> to vector<8x128xf32>
    %13 = arith.addf %10, %12 : vector<8x128xf32>
    %14 = arith.mulf %13, %13 : vector<8x128xf32>
    %15 = arith.mulf %13, %14 : vector<8x128xf32>
    %cst_11 = arith.constant 4.471500e-02 : f32
    %16 = vector.broadcast %cst_11 : f32 to vector<8x128xf32>
    %17 = arith.mulf %16, %15 : vector<8x128xf32>
    %18 = arith.addf %13, %17 : vector<8x128xf32>
    %cst_12 = arith.constant 0.797884583 : f32
    %19 = vector.broadcast %cst_12 : f32 to vector<8x128xf32>
    %20 = arith.mulf %19, %18 : vector<8x128xf32>
    %21 = math.tanh %20 : vector<8x128xf32>
    %cst_13 = arith.constant 1.000000e+00 : f32
    %22 = vector.broadcast %cst_13 : f32 to vector<8x128xf32>
    %23 = arith.addf %22, %21 : vector<8x128xf32>
    %cst_14 = arith.constant 5.000000e-01 : f32
    %24 = vector.broadcast %cst_14 : f32 to vector<8x128xf32>
    %25 = arith.mulf %24, %23 : vector<8x128xf32>
    %26 = arith.mulf %13, %25 : vector<8x128xf32>
    %27 = arith.mulf %26, %8 : vector<8x128xf32>
    %c0_15 = arith.constant 0 : index
    %c0_16 = arith.constant 0 : index
    %28 = vector.load %arg11[%c0_15, %c0_16] : memref<8x128xf32, #tpu.memory_space<vmem>>, vector<8x128xf32>
    %29 = arith.truncf %27 : vector<8x128xf32> to vector<8x128xbf16>
    %c0_17 = arith.constant 0 : index
    %c0_18 = arith.constant 0 : index
    %30 = vector.load %arg7[%c0_17, %c0_18] : memref<128x128xbf16, #tpu.memory_space<vmem>>, vector<128x128xbf16>
    %cst_19 = arith.constant dense<0.000000e+00> : vector<8x128xf32>
    %31 = tpu.matmul %29, %30, %cst_19 {dimension_numbers = #tpu.dot_dimension_numbers<[1], [0], [0], [1], [0, 0, 1, 1], [], []>} : vector<8x128xbf16>, vector<128x128xbf16>, vector<8x128xf32> -> vector<8x128xf32>
    %32 = arith.addf %28, %31 : vector<8x128xf32>
    %c0_20 = arith.constant 0 : index
    %c0_21 = arith.constant 0 : index
    %33 = vector.load %arg11[%c0_20, %c0_21] : memref<8x128xf32, #tpu.memory_space<vmem>>, vector<8x128xf32>
    tpu.vector_store %arg11[%c0_20, %c0_21], %32 {strides = array<i32>} : memref<8x128xf32, #tpu.memory_space<vmem>>, vector<8x128xf32>,
    %c0_i32_22 = arith.constant 0 : i32
    %34 = arith.cmpi eq, %arg1, %c0_i32_22 : i32
    %35 = arith.extui %34 : i1 to i32
    %c0_i32_23 = arith.constant 0 : i32
    %36 = arith.cmpi ne, %35, %c0_i32_23 : i32
    scf.if %36 {
      %c0_24 = arith.constant 0 : index
      %c0_25 = arith.constant 0 : index
      %37 = vector.load %arg11[%c0_24, %c0_25] : memref<8x128xf32, #tpu.memory_space<vmem>>, vector<8x128xf32>
      %c0_26 = arith.constant 0 : index
      %c0_27 = arith.constant 0 : index
      %38 = vector.load %arg8[%c0_26, %c0_27] : memref<1x128xf32, #tpu.memory_space<vmem>>, vector<1x128xf32>
      %39 = vector.broadcast %38 : vector<1x128xf32> to vector<8x128xf32>
      %40 = arith.addf %37, %39 : vector<8x128xf32>
      %c0_28 = arith.constant 0 : index
      %c0_29 = arith.constant 0 : index
      %41 = vector.load %arg9[%c0_28, %c0_29] : memref<8x128xf32, #tpu.memory_space<vmem>>, vector<8x128xf32>
      tpu.vector_store %arg9[%c0_28, %c0_29], %40 {strides = array<i32>} : memref<8x128xf32, #tpu.memory_space<vmem>>, vector<8x128xf32>,
    } else {
    }
    return
  }
  func.func @transform_0(%arg0: i32, %arg1: i32) -> (i32, i32) {
    %c0_i32 = arith.constant 0 : i32
    %c0_i32_0 = arith.constant 0 : i32
    return %arg0, %c0_i32 : i32, i32
  }
  func.func @transform_1(%arg0: i32, %arg1: i32) -> (i32, i32) {
    %c0_i32 = arith.constant 0 : i32
    %c0_i32_0 = arith.constant 0 : i32
    return %c0_i32, %arg1 : i32, i32
  }
  func.func @transform_2(%arg0: i32, %arg1: i32) -> (i32, i32) {
    %c0_i32 = arith.constant 0 : i32
    %c0_i32_0 = arith.constant 0 : i32
    return %c0_i32, %arg1 : i32, i32
  }
  func.func @transform_3(%arg0: i32, %arg1: i32) -> (i32, i32) {
    %c0_i32 = arith.constant 0 : i32
    %c0_i32_0 = arith.constant 0 : i32
    return %c0_i32, %arg1 : i32, i32
  }
  func.func @transform_4(%arg0: i32, %arg1: i32) -> (i32, i32) {
    %c0_i32 = arith.constant 0 : i32
    %c0_i32_0 = arith.constant 0 : i32
    return %c0_i32, %arg1 : i32, i32
  }
  func.func @transform_5(%arg0: i32, %arg1: i32) -> (i32, i32) {
    %c0_i32 = arith.constant 0 : i32
    %c0_i32_0 = arith.constant 0 : i32
    return %arg1, %c0_i32 : i32, i32
  }
  func.func @transform_6(%arg0: i32, %arg1: i32) -> (i32, i32) {
    %c0_i32 = arith.constant 0 : i32
    %c0_i32_0 = arith.constant 0 : i32
    %c0_i32_1 = arith.constant 0 : i32
    return %c0_i32, %c0_i32_0 : i32, i32
  }
  func.func @transform_7(%arg0: i32, %arg1: i32) -> (i32, i32) {
    %c0_i32 = arith.constant 0 : i32
    %c0_i32_0 = arith.constant 0 : i32
    return %arg0, %c0_i32 : i32, i32
  }
}

module attributes {stable_mosaic.version = 11 : i64} {
  func.func @_ff_kernel(%arg0: i32, %arg1: i32, %arg2: memref<8x128xf32, #tpu.memory_space<vmem>>, %arg3: memref<128x128xbf16, #tpu.memory_space<vmem>>, %arg4: memref<128x128xbf16, #tpu.memory_space<vmem>>, %arg5: memref<1x128xf32, #tpu.memory_space<vmem>>, %arg6: memref<1x128xf32, #tpu.memory_space<vmem>>, %arg7: memref<128x128xbf16, #tpu.memory_space<vmem>>, %arg8: memref<1x128xf32, #tpu.memory_space<vmem>>, %arg9: memref<8x128xf32, #tpu.memory_space<vmem>>, %arg10: memref<8x128xbf16, #tpu.memory_space<vmem>>, %arg11: memref<8x128xf32, #tpu.memory_space<vmem>>) attributes {dimension_semantics = [#tpu.dimension_semantics<parallel>, #tpu.dimension_semantics<arbitrary>], iteration_bounds = array<i64: 2, 1>, scalar_prefetch = 0 : i64, scratch_operands = 2 : i64, tpu.core_type = #tpu.core_type<tc>, window_params = [{transform_indices = @transform_0, window_bounds = array<i64: 8, 128>}, {transform_indices = @transform_1, window_bounds = array<i64: 128, 128>}, {transform_indices = @transform_2, window_bounds = array<i64: 128, 128>}, {transform_indices = @transform_3, window_bounds = array<i64: 1, 128>}, {transform_indices = @transform_4, window_bounds = array<i64: 1, 128>}, {transform_indices = @transform_5, window_bounds = array<i64: 128, 128>}, {pipeline_mode = #tpu.pipeline_mode<synchronous>, transform_indices = @transform_6, window_bounds = array<i64: 1, 128>}, {transform_indices = @transform_7, window_bounds = array<i64: 8, 128>}]} {
    %c0_i32 = arith.constant 0 : i32
    %0 = arith.cmpi eq, %arg1, %c0_i32 : i32
    %1 = arith.extui %0 : i1 to i32
    %c0_i32_0 = arith.constant 0 : i32
    %2 = arith.cmpi ne, %1, %c0_i32_0 : i32
    scf.if %2 {
      %c0_24 = arith.constant 0 : index
      %c0_25 = arith.constant 0 : index
      %37 = vector.load %arg2[%c0_24, %c0_25] : memref<8x128xf32, #tpu.memory_space<vmem>>, vector<8x128xf32>
      %38 = arith.mulf %37, %37 : vector<8x128xf32>
      %cst_26 = arith.constant dense<0.000000e+00> : vector<8xf32>
      %39 = vector.multi_reduction <add>, %38, %cst_26 [1] : vector<8x128xf32> to vector<8xf32>
      %40 = vector.shape_cast %39 : vector<8xf32> to vector<8x1xf32>
      %cst_27 = arith.constant 1.000000e-24 : f32
      %41 = vector.broadcast %cst_27 : f32 to vector<8x1xf32>
      %42 = arith.maximumf %40, %41 : vector<8x1xf32>
      %43 = math.rsqrt %42 : vector<8x1xf32>
      %44 = vector.broadcast %43 : vector<8x1xf32> to vector<8x128xf32>
      %45 = arith.mulf %37, %44 : vector<8x128xf32>
      %46 = arith.truncf %45 : vector<8x128xf32> to vector<8x128xbf16>
      %c0_28 = arith.constant 0 : index
      %c0_29 = arith.constant 0 : index
      %47 = vector.load %arg10[%c0_28, %c0_29] : memref<8x128xbf16, #tpu.memory_space<vmem>>, vector<8x128xbf16>
      tpu.vector_store %arg10[%c0_28, %c0_29], %46 {strides = array<i32>} : memref<8x128xbf16, #tpu.memory_space<vmem>>, vector<8x128xbf16>,
      %cst_30 = arith.constant 0.000000e+00 : f32
      %48 = vector.broadcast %cst_30 : f32 to vector<8x128xf32>
      %c0_31 = arith.constant 0 : index
      %c0_32 = arith.constant 0 : index
      %49 = vector.load %arg11[%c0_31, %c0_32] : memref<8x128xf32, #tpu.memory_space<vmem>>, vector<8x128xf32>
      tpu.vector_store %arg11[%c0_31, %c0_32], %48 {strides = array<i32>} : memref<8x128xf32, #tpu.memory_space<vmem>>, vector<8x128xf32>,
    } else {
    }
    %c0 = arith.constant 0 : index
    %c0_1 = arith.constant 0 : index
    %3 = vector.load %arg10[%c0, %c0_1] : memref<8x128xbf16, #tpu.memory_space<vmem>>, vector<8x128xbf16>
    %c0_2 = arith.constant 0 : index
    %c0_3 = arith.constant 0 : index
    %4 = vector.load %arg3[%c0_2, %c0_3] : memref<128x128xbf16, #tpu.memory_space<vmem>>, vector<128x128xbf16>
    %cst = arith.constant dense<0.000000e+00> : vector<8x128xf32>
    %5 = tpu.matmul %3, %4, %cst {dimension_numbers = #tpu.dot_dimension_numbers<[1], [0], [0], [1], [0, 0, 1, 1], [], []>} : vector<8x128xbf16>, vector<128x128xbf16>, vector<8x128xf32> -> vector<8x128xf32>
    %c0_4 = arith.constant 0 : index
    %c0_5 = arith.constant 0 : index
    %6 = vector.load %arg5[%c0_4, %c0_5] : memref<1x128xf32, #tpu.memory_space<vmem>>, vector<1x128xf32>
    %7 = vector.broadcast %6 : vector<1x128xf32> to vector<8x128xf32>
    %8 = arith.addf %5, %7 : vector<8x128xf32>
    %c0_6 = arith.constant 0 : index
    %c0_7 = arith.constant 0 : index
    %9 = vector.load %arg4[%c0_6, %c0_7] : memref<128x128xbf16, #tpu.memory_space<vmem>>, vector<128x128xbf16>
    %cst_8 = arith.constant dense<0.000000e+00> : vector<8x128xf32>
    %10 = tpu.matmul %3, %9, %cst_8 {dimension_numbers = #tpu.dot_dimension_numbers<[1], [0], [0], [1], [0, 0, 1, 1], [], []>} : vector<8x128xbf16>, vector<128x128xbf16>, vector<8x128xf32> -> vector<8x128xf32>
    %c0_9 = arith.constant 0 : index
    %c0_10 = arith.constant 0 : index
    %11 = vector.load %arg6[%c0_9, %c0_10] : memref<1x128xf32, #tpu.memory_space<vmem>>, vector<1x128xf32>
    %12 = vector.broadcast %11 : vector<1x128xf32> to vector<8x128xf32>
    %13 = arith.addf %10, %12 : vector<8x128xf32>
    %14 = arith.mulf %13, %13 : vector<8x128xf32>
    %15 = arith.mulf %13, %14 : vector<8x128xf32>
    %cst_11 = arith.constant 4.471500e-02 : f32
    %16 = vector.broadcast %cst_11 : f32 to vector<8x128xf32>
    %17 = arith.mulf %16, %15 : vector<8x128xf32>
    %18 = arith.addf %13, %17 : vector<8x128xf32>
    %cst_12 = arith.constant 0.797884583 : f32
    %19 = vector.broadcast %cst_12 : f32 to vector<8x128xf32>
    %20 = arith.mulf %19, %18 : vector<8x128xf32>
    %21 = math.tanh %20 : vector<8x128xf32>
    %cst_13 = arith.constant 1.000000e+00 : f32
    %22 = vector.broadcast %cst_13 : f32 to vector<8x128xf32>
    %23 = arith.addf %22, %21 : vector<8x128xf32>
    %cst_14 = arith.constant 5.000000e-01 : f32
    %24 = vector.broadcast %cst_14 : f32 to vector<8x128xf32>
    %25 = arith.mulf %24, %23 : vector<8x128xf32>
    %26 = arith.mulf %13, %25 : vector<8x128xf32>
    %27 = arith.mulf %26, %8 : vector<8x128xf32>
    %c0_15 = arith.constant 0 : index
    %c0_16 = arith.constant 0 : index
    %28 = vector.load %arg11[%c0_15, %c0_16] : memref<8x128xf32, #tpu.memory_space<vmem>>, vector<8x128xf32>
    %29 = arith.truncf %27 : vector<8x128xf32> to vector<8x128xbf16>
    %c0_17 = arith.constant 0 : index
    %c0_18 = arith.constant 0 : index
    %30 = vector.load %arg7[%c0_17, %c0_18] : memref<128x128xbf16, #tpu.memory_space<vmem>>, vector<128x128xbf16>
    %cst_19 = arith.constant dense<0.000000e+00> : vector<8x128xf32>
    %31 = tpu.matmul %29, %30, %cst_19 {dimension_numbers = #tpu.dot_dimension_numbers<[1], [0], [0], [1], [0, 0, 1, 1], [], []>} : vector<8x128xbf16>, vector<128x128xbf16>, vector<8x128xf32> -> vector<8x128xf32>
    %32 = arith.addf %28, %31 : vector<8x128xf32>
    %c0_20 = arith.constant 0 : index
    %c0_21 = arith.constant 0 : index
    %33 = vector.load %arg11[%c0_20, %c0_21] : memref<8x128xf32, #tpu.memory_space<vmem>>, vector<8x128xf32>
    tpu.vector_store %arg11[%c0_20, %c0_21], %32 {strides = array<i32>} : memref<8x128xf32, #tpu.memory_space<vmem>>, vector<8x128xf32>,
    %c0_i32_22 = arith.constant 0 : i32
    %34 = arith.cmpi eq, %arg1, %c0_i32_22 : i32
    %35 = arith.extui %34 : i1 to i32
    %c0_i32_23 = arith.constant 0 : i32
    %36 = arith.cmpi ne, %35, %c0_i32_23 : i32
    scf.if %36 {
      %c0_24 = arith.constant 0 : index
      %c0_25 = arith.constant 0 : index
      %37 = vector.load %arg11[%c0_24, %c0_25] : memref<8x128xf32, #tpu.memory_space<vmem>>, vector<8x128xf32>
      %c0_26 = arith.constant 0 : index
      %c0_27 = arith.constant 0 : index
      %38 = vector.load %arg8[%c0_26, %c0_27] : memref<1x128xf32, #tpu.memory_space<vmem>>, vector<1x128xf32>
      %39 = vector.broadcast %38 : vector<1x128xf32> to vector<8x128xf32>
      %40 = arith.addf %37, %39 : vector<8x128xf32>
      %c0_28 = arith.constant 0 : index
      %c0_29 = arith.constant 0 : index
      %41 = vector.load %arg9[%c0_28, %c0_29] : memref<8x128xf32, #tpu.memory_space<vmem>>, vector<8x128xf32>
      tpu.vector_store %arg9[%c0_28, %c0_29], %40 {strides = array<i32>} : memref<8x128xf32, #tpu.memory_space<vmem>>, vector<8x128xf32>,
    } else {
    }
    return
  }
  func.func @transform_0(%arg0: i32, %arg1: i32) -> (i32, i32) {
    %c0_i32 = arith.constant 0 : i32
    %c0_i32_0 = arith.constant 0 : i32
    return %arg0, %c0_i32 : i32, i32
  }
  func.func @transform_1(%arg0: i32, %arg1: i32) -> (i32, i32) {
    %c0_i32 = arith.constant 0 : i32
    %c0_i32_0 = arith.constant 0 : i32
    return %c0_i32, %arg1 : i32, i32
  }
  func.func @transform_2(%arg0: i32, %arg1: i32) -> (i32, i32) {
    %c0_i32 = arith.constant 0 : i32
    %c0_i32_0 = arith.constant 0 : i32
    return %c0_i32, %arg1 : i32, i32
  }
  func.func @transform_3(%arg0: i32, %arg1: i32) -> (i32, i32) {
    %c0_i32 = arith.constant 0 : i32
    %c0_i32_0 = arith.constant 0 : i32
    return %c0_i32, %arg1 : i32, i32
  }
  func.func @transform_4(%arg0: i32, %arg1: i32) -> (i32, i32) {
    %c0_i32 = arith.constant 0 : i32
    %c0_i32_0 = arith.constant 0 : i32
    return %c0_i32, %arg1 : i32, i32
  }
  func.func @transform_5(%arg0: i32, %arg1: i32) -> (i32, i32) {
    %c0_i32 = arith.constant 0 : i32
    %c0_i32_0 = arith.constant 0 : i32
    return %arg1, %c0_i32 : i32, i32
  }
  func.func @transform_6(%arg0: i32, %arg1: i32) -> (i32, i32) {
    %c0_i32 = arith.constant 0 : i32
    %c0_i32_0 = arith.constant 0 : i32
    %c0_i32_1 = arith.constant 0 : i32
    return %c0_i32, %c0_i32_0 : i32, i32
  }
  func.func @transform_7(%arg0: i32, %arg1: i32) -> (i32, i32) {
    %c0_i32 = arith.constant 0 : i32
    %c0_i32_0 = arith.constant 0 : i32
    return %arg0, %c0_i32 : i32, i32
  }
}

</mosaic_0001>

<llo_original>
// kernel: tpu_custom_call.1
$region0: #{tpu_custom_call.1}
  #allocation0 [shape = 'u32[]', space=smem, size = 0x4, offset = 0x4, fixed_abs, tag = 'smem constant byte address 0x4 - core index']
  #allocation1 [shape = 'u32[144,128]{1,0:T(1,128)}', space=vmem, size = 0x12000, scoped, tag = 'internal scratch']
  #allocation2 [shape = 'bf16[8,128]{1,0:T(8,128)(2,1)}', space=vmem, size = 0x800, scoped, tag = 'scratch operand']
  #allocation3 [shape = 'f32[8,128]{1,0:T(8,128)}', space=vmem, size = 0x1000, scoped, tag = 'scratch operand']
  %s0 = inlined_call_operand.hbm [shape: f32[16,128], index: 0, kind: input, shape index: {}]
  %s1 = inlined_call_operand.hbm [shape: bf16[128,128], index: 1, kind: input, shape index: {}]
  %s2 = inlined_call_operand.hbm [shape: bf16[128,128], index: 2, kind: input, shape index: {}]
  %s3 = inlined_call_operand.vmem [shape: f32[1,128], index: 3, kind: input, shape index: {}]
  %s4 = inlined_call_operand.vmem [shape: f32[1,128], index: 4, kind: input, shape index: {}]
  %s5 = inlined_call_operand.hbm [shape: bf16[128,128], index: 5, kind: input, shape index: {}]
  %s6 = inlined_call_operand.vmem [shape: f32[1,128], index: 6, kind: input, shape index: {}]
  %s7 = inlined_call_operand.hbm [shape: f32[16,128], index: 7, kind: output, shape index: {}]
  %s8 = sld [smem:[#allocation0]]
  $region85: #{tpu_custom_call.1} parent=0
    _
  %s10 = ssub.s32 1, %s8
  %s11 = scalar_select 0, %s10, %s8
  $region1: #{tpu_custom_call.1} parent=0
    #allocation4 [shape = 'u8[8192]{0}', space=vmem, size = 0x2000, scoped, tag = 'input window, operand 0']
    #allocation5 [shape = 's32[2]{0}', space=sflag, size = 0x8, scoped, tag = 'scoped memory for tpu_custom_call.1']
    #allocation6 [shape = 's32[2]{0}', space=sflag, size = 0x8, scoped, tag = 'scoped memory for tpu_custom_call.1']
    #allocation7 [shape = 'u8[32768]{0}', space=vmem, size = 0x8000, scoped, tag = 'input window, operand 1, single buffered']
    #allocation8 [shape = 's32[1]{0}', space=sflag, size = 0x4, scoped, tag = 'scoped memory for tpu_custom_call.1']
    #allocation9 [shape = 'u8[32768]{0}', space=vmem, size = 0x8000, scoped, tag = 'input window, operand 2, single buffered']
    #allocation10 [shape = 'u8[32768]{0}', space=vmem, size = 0x8000, scoped, tag = 'input window, operand 5, single buffered']
    #allocation11 [shape = 's32[1]{0}', space=sflag, size = 0x4, scoped, tag = 'scoped memory for tpu_custom_call.1']
    #allocation12 [shape = 'u8[8192]{0}', space=vmem, size = 0x2000, scoped, tag = 'output window, operand 0']
    %12 = vsyncpa [#allocation5], 0
    %s13 = scalar_lea.sflag [#allocation5], 1
    %14 = vsyncpa %s13, 0
    %15 = vsyncpa [#allocation8], 0
    %16 = vsyncpa [#allocation11], 0
    %17 = vsyncpa [#allocation6], 0
    %s18 = scalar_lea.sflag [#allocation6], 1
    %19 = vsyncpa %s18, 0
    loop: start=0, step=1, limit=4
    $region2: #{tpu_custom_call.1} parent=1 // loop_pre_header
      _
    $region3: #{tpu_custom_call.1} parent=1 // loop_header
      %s21 = sphi 0, %s25
      %p22 = scmp.ge.s32.totalorder %s21, 4
      %s28 = sphi 0, %s40
      %s29 = sphi 0, %s36
      %s30 = sphi 0, %s28
      %s31 = sphi 0, %s29
      %s32 = sphi 0, %s30
      %s33 = sphi 0, %s31
      %s43 = sphi 0, %s45
      %s46 = sphi 0, %s43
      %s47 = sphi 0, %s46
      %s63 = sphi 0, %s47
      %s69 = sphi 0, %s71
      %s72 = sphi 0, %s69
      %s73 = sphi 0, %s72
      %s89 = sphi 0, %s73
      %s95 = sphi 0, %s97
      %s98 = sphi 0, %s95
      %s99 = sphi 0, %s98
      %s115 = sphi 0, %s99
      %s121 = sphi 0, %s123
      %s124 = sphi 0, %s121
      %s125 = sphi 0, %s124
      %s141 = sphi 0, %s125
      %s147 = sphi 0, %s149
      %s150 = sphi 0, %s147
      %s151 = sphi 0, %s150
      %s167 = sphi 0, %s151
      %s173 = sphi 0, %s175
      %s176 = sphi 0, %s173
      %s177 = sphi 0, %s176
      %s193 = sphi 0, %s177
      %s197 = sphi 0, %s197
      %s199 = sphi 0, %s197
      %s200 = sphi 0, %s199
      %s214 = sphi 0, %s200
      %s220 = sphi 0, %s222
      %s223 = sphi 0, %s220
      %s224 = sphi 0, %s223
      %s240 = sphi 0, %s224
    $region4: #{tpu_custom_call.1} parent=1 // loop_header_branch
      %24 = sbr.rel (%p22) target = $region8
    $region5: #{tpu_custom_call.1} parent=1 // loop_body
      %s26 = ssub.s32 %s21, 1
      %s27 = ssub.s32 %s21, 2
      %s34 = sadd.s32 1, %s29
      %p35 = scmp.ge.s32.totalorder %s34, 1
      %s36 = scalar_select %p35, 0, %s34
      %s37 = sadd.s32 1, %s28
      %s38 = scalar_select %p35, %s37, %s28
      %p39 = scmp.ge.s32.totalorder %s38, 2
      %s40 = scalar_select %p39, 0, %s38
      %s41 = ssub.s32 %s28, %s40
      %p42 = scmp.eq.s32.totalorder %s41, 0
      %s44 = sadd.s32 %s43, 1
      %s45 = scalar_select %p42, %s43, %s44
      %p48 = pneg %p42
      %p49 = scmp.eq.s32.totalorder %s21, 1
      %p50 = por %p48, %p49
      %p51 = scmp.ne.s32.totalorder %s43, %s46
      %p52 = scmp.eq.s32.totalorder %s21, 0
      %p53 = por %p51, %p52
      %p54 = scmp.ne.s32.totalorder %s43, %s46
      %p55 = scmp.eq.s32.totalorder %s26, 1
      %p56 = por %p54, %p55
      %p57 = scmp.ne.s32.totalorder %s46, %s47
      %p58 = scmp.eq.s32.totalorder %s26, 0
      %p59 = por %p57, %p58
      %p60 = scmp.ne.s32.totalorder %s46, %s47
      %p61 = scmp.eq.s32.totalorder %s27, 1
      %p62 = por %p60, %p61
      %p64 = scmp.ne.s32.totalorder %s47, %s63
      %p65 = scmp.eq.s32.totalorder %s27, 0
      %p66 = por %p64, %p65
      %s67 = ssub.s32 %s29, %s36
      %p68 = scmp.eq.s32.totalorder %s67, 0
      %s70 = sadd.s32 %s69, 1
      %s71 = scalar_select %p68, %s69, %s70
      %p74 = pneg %p68
      %p75 = scmp.eq.s32.totalorder %s21, 1
      %p76 = por %p74, %p75
      %p77 = scmp.ne.s32.totalorder %s69, %s72
      %p78 = scmp.eq.s32.totalorder %s21, 0
      %p79 = por %p77, %p78
      %p80 = scmp.ne.s32.totalorder %s69, %s72
      %p81 = scmp.eq.s32.totalorder %s26, 1
      %p82 = por %p80, %p81
      %p83 = scmp.ne.s32.totalorder %s72, %s73
      %p84 = scmp.eq.s32.totalorder %s26, 0
      %p85 = por %p83, %p84
      %p86 = scmp.ne.s32.totalorder %s72, %s73
      %p87 = scmp.eq.s32.totalorder %s27, 1
      %p88 = por %p86, %p87
      %p90 = scmp.ne.s32.totalorder %s73, %s89
      %p91 = scmp.eq.s32.totalorder %s27, 0
      %p92 = por %p90, %p91
      %s93 = ssub.s32 %s29, %s36
      %p94 = scmp.eq.s32.totalorder %s93, 0
      %s96 = sadd.s32 %s95, 1
      %s97 = scalar_select %p94, %s95, %s96
      %p100 = pneg %p94
      %p101 = scmp.eq.s32.totalorder %s21, 1
      %p102 = por %p100, %p101
      %p103 = scmp.ne.s32.totalorder %s95, %s98
      %p104 = scmp.eq.s32.totalorder %s21, 0
      %p105 = por %p103, %p104
      %p106 = scmp.ne.s32.totalorder %s95, %s98
      %p107 = scmp.eq.s32.totalorder %s26, 1
      %p108 = por %p106, %p107
      %p109 = scmp.ne.s32.totalorder %s98, %s99
      %p110 = scmp.eq.s32.totalorder %s26, 0
      %p111 = por %p109, %p110
      %p112 = scmp.ne.s32.totalorder %s98, %s99
      %p113 = scmp.eq.s32.totalorder %s27, 1
      %p114 = por %p112, %p113
      %p116 = scmp.ne.s32.totalorder %s99, %s115
      %p117 = scmp.eq.s32.totalorder %s27, 0
      %p118 = por %p116, %p117
      %s119 = ssub.s32 %s29, %s36
      %p120 = scmp.eq.s32.totalorder %s119, 0
      %s122 = sadd.s32 %s121, 1
      %s123 = scalar_select %p120, %s121, %s122
      %p126 = pneg %p120
      %p127 = scmp.eq.s32.totalorder %s21, 1
      %p128 = por %p126, %p127
      %p129 = scmp.ne.s32.totalorder %s121, %s124
      %p130 = scmp.eq.s32.totalorder %s21, 0
      %p131 = por %p129, %p130
      %p132 = scmp.ne.s32.totalorder %s121, %s124
      %p133 = scmp.eq.s32.totalorder %s26, 1
      %p134 = por %p132, %p133
      %p135 = scmp.ne.s32.totalorder %s124, %s125
      %p136 = scmp.eq.s32.totalorder %s26, 0
      %p137 = por %p135, %p136
      %p138 = scmp.ne.s32.totalorder %s124, %s125
      %p139 = scmp.eq.s32.totalorder %s27, 1
      %p140 = por %p138, %p139
      %p142 = scmp.ne.s32.totalorder %s125, %s141
      %p143 = scmp.eq.s32.totalorder %s27, 0
      %p144 = por %p142, %p143
      %s145 = ssub.s32 %s29, %s36
      %p146 = scmp.eq.s32.totalorder %s145, 0
      %s148 = sadd.s32 %s147, 1
      %s149 = scalar_select %p146, %s147, %s148
      %p152 = pneg %p146
      %p153 = scmp.eq.s32.totalorder %s21, 1
      %p154 = por %p152, %p153
      %p155 = scmp.ne.s32.totalorder %s147, %s150
      %p156 = scmp.eq.s32.totalorder %s21, 0
      %p157 = por %p155, %p156
      %p158 = scmp.ne.s32.totalorder %s147, %s150
      %p159 = scmp.eq.s32.totalorder %s26, 1
      %p160 = por %p158, %p159
      %p161 = scmp.ne.s32.totalorder %s150, %s151
      %p162 = scmp.eq.s32.totalorder %s26, 0
      %p163 = por %p161, %p162
      %p164 = scmp.ne.s32.totalorder %s150, %s151
      %p165 = scmp.eq.s32.totalorder %s27, 1
      %p166 = por %p164, %p165
      %p168 = scmp.ne.s32.totalorder %s151, %s167
      %p169 = scmp.eq.s32.totalorder %s27, 0
      %p170 = por %p168, %p169
      %s171 = ssub.s32 %s29, %s36
      %p172 = scmp.eq.s32.totalorder %s171, 0
      %s174 = sadd.s32 %s173, 1
      %s175 = scalar_select %p172, %s173, %s174
      %p178 = pneg %p172
      %p179 = scmp.eq.s32.totalorder %s21, 1
      %p180 = por %p178, %p179
      %p181 = scmp.ne.s32.totalorder %s173, %s176
      %p182 = scmp.eq.s32.totalorder %s21, 0
      %p183 = por %p181, %p182
      %p184 = scmp.ne.s32.totalorder %s173, %s176
      %p185 = scmp.eq.s32.totalorder %s26, 1
      %p186 = por %p184, %p185
      %p187 = scmp.ne.s32.totalorder %s176, %s177
      %p188 = scmp.eq.s32.totalorder %s26, 0
      %p189 = por %p187, %p188
      %p190 = scmp.ne.s32.totalorder %s176, %s177
      %p191 = scmp.eq.s32.totalorder %s27, 1
      %p192 = por %p190, %p191
      %p194 = scmp.ne.s32.totalorder %s177, %s193
      %p195 = scmp.eq.s32.totalorder %s27, 0
      %p196 = por %p194, %p195
      %s198 = sadd.s32 %s197, 1
      %p201 = scmp.eq.s32.totalorder %s21, 1
      %p202 = scmp.ne.s32.totalorder %s197, %s199
      %p203 = scmp.eq.s32.totalorder %s21, 0
      %p204 = por %p202, %p203
      %p205 = scmp.ne.s32.totalorder %s197, %s199
      %p206 = scmp.eq.s32.totalorder %s26, 1
      %p207 = por %p205, %p206
      %p208 = scmp.ne.s32.totalorder %s199, %s200
      %p209 = scmp.eq.s32.totalorder %s26, 0
      %p210 = por %p208, %p209
      %p211 = scmp.ne.s32.totalorder %s199, %s200
      %p212 = scmp.eq.s32.totalorder %s27, 1
      %p213 = por %p211, %p212
      %p215 = scmp.ne.s32.totalorder %s200, %s214
      %p216 = scmp.eq.s32.totalorder %s27, 0
      %p217 = por %p215, %p216
      %s218 = ssub.s32 %s28, %s40
      %p219 = scmp.eq.s32.totalorder %s218, 0
      %s221 = sadd.s32 %s220, 1
      %s222 = scalar_select %p219, %s220, %s221
      %p225 = pneg %p219
      %p226 = scmp.eq.s32.totalorder %s21, 1
      %p227 = por %p225, %p226
      %p228 = scmp.ne.s32.totalorder %s220, %s223
      %p229 = scmp.eq.s32.totalorder %s21, 0
      %p230 = por %p228, %p229
      %p231 = scmp.ne.s32.totalorder %s220, %s223
      %p232 = scmp.eq.s32.totalorder %s26, 1
      %p233 = por %p231, %p232
      %p234 = scmp.ne.s32.totalorder %s223, %s224
      %p235 = scmp.eq.s32.totalorder %s26, 0
      %p236 = por %p234, %p235
      %p237 = scmp.ne.s32.totalorder %s223, %s224
      %p238 = scmp.eq.s32.totalorder %s27, 1
      %p239 = por %p237, %p238
      %p241 = scmp.ne.s32.totalorder %s224, %s240
      %p242 = scmp.eq.s32.totalorder %s27, 0
      %p243 = por %p241, %p242
      %p244 = scmp.le.s32.totalorder 1, %s21
      %p245 = scmp.lt.s32.totalorder %s21, 3
      %p246 = pnand %p244, %p245
      %p247 = pneg %p246
      // Predicated region
      $region9: #{tpu_custom_call.1} parent=5 // pred_check
        _
      $region10: #{tpu_custom_call.1} parent=5 // pred_check_branch
        %249 = sbr.rel (%p246) target = $region12
      $region11: #{tpu_custom_call.1} parent=5 // pred_region
        %s250 = ssub.s32 %s21, 1
        // Predicated region
        $region13: #{tpu_custom_call.1} parent=11 // pred_check
          %p251 = pneg %p85
        $region14: #{tpu_custom_call.1} parent=11 // pred_check_branch
          %253 = sbr.rel (%p251) target = $region16
        $region15: #{tpu_custom_call.1} parent=11 // pred_region
          %s255 = ssub.s32 1024, 1024
          %256 = vsyncadd [#allocation8], %s255
          %s257 = smul.addr %s31, 64
          %s258 = scalar_lea.hbm %s1, %s257
          %s259 = sshll.u32 [#allocation7], 4
          %s260 = int_to_ptr.vmem [resolvable:$true] %s259
          %265 = dma.hbm_to_vmem [thread:$0]  %s258, 1024, %s260, [#allocation8], 64, 64, 4
        $region16: #{tpu_custom_call.1} parent=11 // pred_fallthru
          _
        // Predicated region
        $region17: #{tpu_custom_call.1} parent=11 // pred_check
          %p266 = pneg %p111
        $region18: #{tpu_custom_call.1} parent=11 // pred_check_branch
          %268 = sbr.rel (%p266) target = $region20
        $region19: #{tpu_custom_call.1} parent=11 // pred_region
          %s270 = ssub.s32 1024, 1024
          %271 = vsyncadd [#allocation8], %s270
          %s272 = smul.addr %s31, 64
          %s273 = scalar_lea.hbm %s2, %s272
          %s274 = sshll.u32 [#allocation9], 4
          %s275 = int_to_ptr.vmem [resolvable:$true] %s274
          %280 = dma.hbm_to_vmem [thread:$0]  %s273, 1024, %s275, [#allocation8], 64, 64, 4
        $region20: #{tpu_custom_call.1} parent=11 // pred_fallthru
          _
        // Predicated region
        $region21: #{tpu_custom_call.1} parent=11 // pred_check
          %p281 = pneg %p137
        $region22: #{tpu_custom_call.1} parent=11 // pred_check_branch
          %283 = sbr.rel (%p281) target = $region24
        $region23: #{tpu_custom_call.1} parent=11 // pred_region
          %p284 = scmp.lt.s32.totalorder %s31, 0
          %s285 = scalar_select %p284, %s31, 0
          %s286 = scalar_lea.vmem %s3, %s285
        $region24: #{tpu_custom_call.1} parent=11 // pred_fallthru
          _
        // Predicated region
        $region25: #{tpu_custom_call.1} parent=11 // pred_check
          %p287 = pneg %p163
        $region26: #{tpu_custom_call.1} parent=11 // pred_check_branch
          %289 = sbr.rel (%p287) target = $region28
        $region27: #{tpu_custom_call.1} parent=11 // pred_region
          %p290 = scmp.lt.s32.totalorder %s31, 0
          %s291 = scalar_select %p290, %s31, 0
          %s292 = scalar_lea.vmem %s4, %s291
        $region28: #{tpu_custom_call.1} parent=11 // pred_fallthru
          _
        // Predicated region
        $region29: #{tpu_custom_call.1} parent=11 // pred_check
          %p293 = pneg %p189
        $region30: #{tpu_custom_call.1} parent=11 // pred_check_branch
          %295 = sbr.rel (%p293) target = $region32
        $region31: #{tpu_custom_call.1} parent=11 // pred_region
          %s296 = smul.u32 16, %s31
          %s298 = ssub.s32 1024, 1024
          %299 = vsyncadd [#allocation11], %s298
          %s300 = smul.addr %s296, 64
          %s301 = scalar_lea.hbm %s5, %s300
          %s302 = sshll.u32 [#allocation10], 4
          %s303 = int_to_ptr.vmem [resolvable:$true] %s302
          %308 = dma.hbm_to_vmem [thread:$0]  %s301, 1024, %s303, [#allocation11], 64, 64, 4
        $region32: #{tpu_custom_call.1} parent=11 // pred_fallthru
          _
        // Predicated region
        $region33: #{tpu_custom_call.1} parent=11 // pred_check
          %p309 = pneg %p210
        $region34: #{tpu_custom_call.1} parent=11 // pred_check_branch
          %311 = sbr.rel (%p309) target = $region36
        $region35: #{tpu_custom_call.1} parent=11 // pred_region
          _
        $region36: #{tpu_custom_call.1} parent=11 // pred_fallthru
          _
      $region12: #{tpu_custom_call.1} parent=5 // pred_fallthru
        _
      %p312 = scmp.lt.s32.totalorder %s21, 2
      // Predicated region
      $region37: #{tpu_custom_call.1} parent=5 // pred_check
        %p313 = pneg %p312
      $region38: #{tpu_custom_call.1} parent=5 // pred_check_branch
        %315 = sbr.rel (%p313) target = $region40
      $region39: #{tpu_custom_call.1} parent=5 // pred_region
        // Predicated region
        $region41: #{tpu_custom_call.1} parent=39 // pred_check
          %p316 = pneg %p53
        $region42: #{tpu_custom_call.1} parent=39 // pred_check_branch
          %318 = sbr.rel (%p316) target = $region44
        $region43: #{tpu_custom_call.1} parent=39 // pred_region
          %s319 = sand.u32 %s43, 1
          %s320 = scalar_lea.sflag [#allocation5], %s319
          %s321 = sand.u32 %s43, 1
          %s322 = smul.addr %s321, 8
          %s323 = scalar_lea.vmem [#allocation4], %s322
          %s325 = ssub.s32 128, 128
          %326 = vsyncadd %s320, %s325
          %s327 = smul.addr %s28, 128
          %s328 = scalar_lea.hbm %s0, %s327
          %s330 = sshll.u32 %s323, 4
          %s331 = int_to_ptr.vmem [resolvable:$true] %s330
          %333 = dma.hbm_to_vmem [thread:$0]  %s328, 128, %s331, %s320
        $region44: #{tpu_custom_call.1} parent=39 // pred_fallthru
          _
      $region40: #{tpu_custom_call.1} parent=5 // pred_fallthru
        _
      %p334 = scmp.le.s32.totalorder 1, %s21
      %p335 = scmp.lt.s32.totalorder %s21, 3
      %p336 = pnand %p334, %p335
      %p337 = pneg %p336
      // Predicated region
      $region45: #{tpu_custom_call.1} parent=5 // pred_check
        _
      $region46: #{tpu_custom_call.1} parent=5 // pred_check_branch
        %339 = sbr.rel (%p336) target = $region48
      $region47: #{tpu_custom_call.1} parent=5 // pred_region
        %s340 = ssub.s32 %s21, 1
        %s341 = sand.u32 %s46, 1
        %s342 = scalar_lea.sflag [#allocation5], %s341
        %s343 = sand.u32 %s46, 1
        %s344 = smul.addr %s343, 8
        %s345 = scalar_lea.vmem [#allocation4], %s344
        // Predicated region
        $region49: #{tpu_custom_call.1} parent=47 // pred_check
          %p346 = pneg %p59
        $region50: #{tpu_custom_call.1} parent=47 // pred_check_branch
          %348 = sbr.rel (%p346) target = $region52
        $region51: #{tpu_custom_call.1} parent=47 // pred_region
          %349 = dma.done %s342, 128
        $region52: #{tpu_custom_call.1} parent=47 // pred_fallthru
          _
        // Predicated region
        $region53: #{tpu_custom_call.1} parent=47 // pred_check
          %p350 = pneg %p85
        $region54: #{tpu_custom_call.1} parent=47 // pred_check_branch
          %352 = sbr.rel (%p350) target = $region56
        $region55: #{tpu_custom_call.1} parent=47 // pred_region
          %353 = dma.done [#allocation8], 1024
        $region56: #{tpu_custom_call.1} parent=47 // pred_fallthru
          _
        // Predicated region
        $region57: #{tpu_custom_call.1} parent=47 // pred_check
          %p354 = pneg %p111
        $region58: #{tpu_custom_call.1} parent=47 // pred_check_branch
          %356 = sbr.rel (%p354) target = $region60
        $region59: #{tpu_custom_call.1} parent=47 // pred_region
          %357 = dma.done [#allocation8], 1024
        $region60: #{tpu_custom_call.1} parent=47 // pred_fallthru
          _
        // Predicated region
        $region61: #{tpu_custom_call.1} parent=47 // pred_check
          %p358 = pneg %p189
        $region62: #{tpu_custom_call.1} parent=47 // pred_check_branch
          %360 = sbr.rel (%p358) target = $region64
        $region63: #{tpu_custom_call.1} parent=47 // pred_region
          %361 = dma.done [#allocation11], 1024
        $region64: #{tpu_custom_call.1} parent=47 // pred_fallthru
          _
        %s362 = sand.u32 %s46, 1
        %s363 = scalar_lea.sflag [#allocation5], %s362
        %s364 = sand.u32 %s46, 1
        %s365 = smul.addr %s364, 8
        %s366 = scalar_lea.vmem [#allocation4], %s365
        %p367 = pneg %p59
        %p368 = pneg %p56
        %p369 = pneg %p85
        %p370 = pneg %p82
        %p371 = pneg %p111
        %p372 = pneg %p108
        %p373 = scmp.lt.s32.totalorder %s31, 0
        %s374 = scalar_select %p373, %s31, 0
        %s375 = scalar_lea.vmem %s3, %s374
        %p376 = pneg %p137
        %p377 = pneg %p134
        %p378 = scmp.lt.s32.totalorder %s31, 0
        %s379 = scalar_select %p378, %s31, 0
        %s380 = scalar_lea.vmem %s4, %s379
        %p381 = pneg %p163
        %p382 = pneg %p160
        %p383 = pneg %p189
        %p384 = pneg %p186
        %p385 = pneg %p210
        %p386 = pneg %p207
        %p387 = pneg %p236
        %p388 = pneg %p233
        %s389 = sand.u32 %s223, 1
        %s390 = scalar_lea.sflag [#allocation6], %s389
        %s391 = sand.u32 %s223, 1
        %s392 = smul.addr %s391, 8
        %s393 = scalar_lea.vmem [#allocation12], %s392
        %p394 = scmp.lt.s32.totalorder %s31, 0
        %s395 = scalar_select %p394, %s31, 0
        %s396 = scalar_lea.vmem %s3, %s395
        %p397 = scmp.lt.s32.totalorder %s31, 0
        %s398 = scalar_select %p397, %s31, 0
        %s399 = scalar_lea.vmem %s4, %s398
        %s400 = smul.u32 16, %s31
        %p402 = scmp.eq.s32.totalorder %s31, 0
        // Predicated region
        $region65: #{tpu_custom_call.1} parent=47 // pred_check
          %p403 = pneg %p402
        $region66: #{tpu_custom_call.1} parent=47 // pred_check_branch
          %405 = sbr.rel (%p403) target = $region68
        $region67: #{tpu_custom_call.1} parent=47 // pred_region
          %v406 = vld [vmem:[%s345] sm:$0xff]
          %v407 = vmul.f32 %v406, %v406
          %408 = vadd.xlane.f32.xlu0 %v407
          %v409 = vpop.xlane.xlu0 %408
          %v410 = vmax.f32 %v409, 1e-24
          %v411 = vrsqrt.pop %v410
          %v412 = vmul.f32 %v406, %v411
          %v413 = vpack.c.bf16 %v412, %v412
          %414 = vst [vmem:[#allocation2] sm:$0xf] %v413
          %415 = vst [vmem:[#allocation3] sm:$0xff] 0.0
        $region68: #{tpu_custom_call.1} parent=47 // pred_fallthru
          _
        %v416 = vld [vmem:[#allocation2] sm:$0xf]
        %v417 = vld [vmem:[#allocation7] sm:$0xf]
        %v418 = vld [vmem:[#allocation7 + $0x4] sm:$0xf]
        %v419 = vld [vmem:[#allocation7 + $0x8] sm:$0xf]
        %v420 = vld [vmem:[#allocation7 + $0xc] sm:$0xf]
        %v421 = vld [vmem:[#allocation7 + $0x10] sm:$0xf]
        %v422 = vld [vmem:[#allocation7 + $0x14] sm:$0xf]
        %v423 = vld [vmem:[#allocation7 + $0x18] sm:$0xf]
        %v424 = vld [vmem:[#allocation7 + $0x1c] sm:$0xf]
        %v425 = vld [vmem:[#allocation7 + $0x20] sm:$0xf]
        %v426 = vld [vmem:[#allocation7 + $0x24] sm:$0xf]
        %v427 = vld [vmem:[#allocation7 + $0x28] sm:$0xf]
        %v428 = vld [vmem:[#allocation7 + $0x2c] sm:$0xf]
        %v429 = vld [vmem:[#allocation7 + $0x30] sm:$0xf]
        %v430 = vld [vmem:[#allocation7 + $0x34] sm:$0xf]
        %v431 = vld [vmem:[#allocation7 + $0x38] sm:$0xf]
        %v432 = vld [vmem:[#allocation7 + $0x3c] sm:$0xf]
        %v433 = vld [vmem:[%s396] sm:$0x1]
        %v435 = vlaneseq
        %v436 = vshrl.u32 %v435, 7
        %v437 = vsub.s32 0, %v436
        %v438 = vrot.slane %v433, %v437
        %v456 = vunpack.c.l.b16 %v417
        %v457 = vunpack.c.l.b16 %v418
        %v458 = vunpack.c.l.b16 %v419
        %v459 = vunpack.c.l.b16 %v420
        %v460 = vunpack.c.l.b16 %v421
        %v461 = vunpack.c.l.b16 %v422
        %v462 = vunpack.c.l.b16 %v423
        %v463 = vunpack.c.l.b16 %v424
        %v464 = vunpack.c.l.b16 %v425
        %v465 = vunpack.c.l.b16 %v426
        %v466 = vunpack.c.l.b16 %v427
        %v467 = vunpack.c.l.b16 %v428
        %v468 = vunpack.c.l.b16 %v429
        %v469 = vunpack.c.l.b16 %v430
        %v470 = vunpack.c.l.b16 %v431
        %v471 = vunpack.c.l.b16 %v432
        %v472 = vpack.c.b16 %v457, %v456
        %v473 = vpack.c.b16 %v459, %v458
        %v474 = vpack.c.b16 %v461, %v460
        %v475 = vpack.c.b16 %v463, %v462
        %v476 = vpack.c.b16 %v465, %v464
        %v477 = vpack.c.b16 %v467, %v466
        %v478 = vpack.c.b16 %v469, %v468
        %v479 = vpack.c.b16 %v471, %v470
        %488 = vmatprep.subr.bf16.mxu0 0
        %489 = vmatpush1.bf16.msra.mxu0 %v472
        %490 = vmatprep.subr.bf16.mxu0 0
        %491 = vmatpush1.bf16.msra.mxu0 %v473
        %492 = vmatprep.subr.bf16.mxu0 0
        %493 = vmatpush1.bf16.msra.mxu0 %v474
        %494 = vmatprep.subr.bf16.mxu0 0
        %495 = vmatpush1.bf16.msra.mxu0 %v475
        %496 = vmatprep.subr.bf16.mxu0 0
        %497 = vmatpush1.bf16.msra.mxu0 %v476
        %498 = vmatprep.subr.bf16.mxu0 0
        %499 = vmatpush1.bf16.msra.mxu0 %v477
        %500 = vmatprep.subr.bf16.mxu0 0
        %501 = vmatpush1.bf16.msra.mxu0 %v478
        %502 = vmatprep.subr.bf16.mxu0 0
        %503 = vmatpush1.bf16.msra.mxu0 %v479
        %504 = vmatprep.subr.bf16.mxu0 0
        %505 = vmatpush1.bf16.msra.mxu0 0
        %506 = vmatprep.subr.bf16.mxu0 0
        %507 = vmatpush1.bf16.msra.mxu0 0
        %508 = vmatprep.subr.bf16.mxu0 0
        %509 = vmatpush1.bf16.msra.mxu0 0
        %510 = vmatprep.subr.bf16.mxu0 0
        %511 = vmatpush1.bf16.msra.mxu0 0
        %512 = vmatprep.subr.bf16.mxu0 0
        %513 = vmatpush1.bf16.msra.mxu0 0
        %514 = vmatprep.subr.bf16.mxu0 0
        %515 = vmatpush1.bf16.msra.mxu0 0
        %516 = vmatprep.subr.bf16.mxu0 0
        %517 = vmatpush1.bf16.msra.mxu0 0
        %518 = vmatprep.subr.bf16.mxu0 0
        %519 = vmatpush1.bf16.msra.mxu0 0
        %520 = vmatprep.mubr.bf16.mxu0 0
        %521 = vmatmul.mubr.bf16.gmra.mrb[0].mxu0 %v416
        %v522 = vpop.f32.mrb[0].mxu0
        %v523 = vadd.f32 %v438, %v522
        %v524 = vpop.f32.mrb[0].mxu0
        %v525 = vpop.f32.mrb[0].mxu0
        %v526 = vpop.f32.mrb[0].mxu0
        %527 = vdwg.mxu0
        %v528 = vld [vmem:[#allocation9] sm:$0xf]
        %v529 = vld [vmem:[#allocation9 + $0x4] sm:$0xf]
        %v530 = vld [vmem:[#allocation9 + $0x8] sm:$0xf]
        %v531 = vld [vmem:[#allocation9 + $0xc] sm:$0xf]
        %v532 = vld [vmem:[#allocation9 + $0x10] sm:$0xf]
        %v533 = vld [vmem:[#allocation9 + $0x14] sm:$0xf]
        %v534 = vld [vmem:[#allocation9 + $0x18] sm:$0xf]
        %v535 = vld [vmem:[#allocation9 + $0x1c] sm:$0xf]
        %v536 = vld [vmem:[#allocation9 + $0x20] sm:$0xf]
        %v537 = vld [vmem:[#allocation9 + $0x24] sm:$0xf]
        %v538 = vld [vmem:[#allocation9 + $0x28] sm:$0xf]
        %v539 = vld [vmem:[#allocation9 + $0x2c] sm:$0xf]
        %v540 = vld [vmem:[#allocation9 + $0x30] sm:$0xf]
        %v541 = vld [vmem:[#allocation9 + $0x34] sm:$0xf]
        %v542 = vld [vmem:[#allocation9 + $0x38] sm:$0xf]
        %v543 = vld [vmem:[#allocation9 + $0x3c] sm:$0xf]
        %v544 = vld [vmem:[%s399] sm:$0x1]
        %v546 = vlaneseq
        %v547 = vshrl.u32 %v546, 7
        %v548 = vsub.s32 0, %v547
        %v549 = vrot.slane %v544, %v548
        %v567 = vunpack.c.l.b16 %v528
        %v568 = vunpack.c.l.b16 %v529
        %v569 = vunpack.c.l.b16 %v530
        %v570 = vunpack.c.l.b16 %v531
        %v571 = vunpack.c.l.b16 %v532
        %v572 = vunpack.c.l.b16 %v533
        %v573 = vunpack.c.l.b16 %v534
        %v574 = vunpack.c.l.b16 %v535
        %v575 = vunpack.c.l.b16 %v536
        %v576 = vunpack.c.l.b16 %v537
        %v577 = vunpack.c.l.b16 %v538
        %v578 = vunpack.c.l.b16 %v539
        %v579 = vunpack.c.l.b16 %v540
        %v580 = vunpack.c.l.b16 %v541
        %v581 = vunpack.c.l.b16 %v542
        %v582 = vunpack.c.l.b16 %v543
        %v583 = vpack.c.b16 %v568, %v567
        %v584 = vpack.c.b16 %v570, %v569
        %v585 = vpack.c.b16 %v572, %v571
        %v586 = vpack.c.b16 %v574, %v573
        %v587 = vpack.c.b16 %v576, %v575
        %v588 = vpack.c.b16 %v578, %v577
        %v589 = vpack.c.b16 %v580, %v579
        %v590 = vpack.c.b16 %v582, %v581
        %599 = vmatprep.subr.bf16.mxu0 0
        %600 = vmatpush1.bf16.msra.mxu0 %v583
        %601 = vmatprep.subr.bf16.mxu0 0
        %602 = vmatpush1.bf16.msra.mxu0 %v584
        %603 = vmatprep.subr.bf16.mxu0 0
        %604 = vmatpush1.bf16.msra.mxu0 %v585
        %605 = vmatprep.subr.bf16.mxu0 0
        %606 = vmatpush1.bf16.msra.mxu0 %v586
        %607 = vmatprep.subr.bf16.mxu0 0
        %608 = vmatpush1.bf16.msra.mxu0 %v587
        %609 = vmatprep.subr.bf16.mxu0 0
        %610 = vmatpush1.bf16.msra.mxu0 %v588
        %611 = vmatprep.subr.bf16.mxu0 0
        %612 = vmatpush1.bf16.msra.mxu0 %v589
        %613 = vmatprep.subr.bf16.mxu0 0
        %614 = vmatpush1.bf16.msra.mxu0 %v590
        %615 = vmatprep.subr.bf16.mxu0 0
        %616 = vmatpush1.bf16.msra.mxu0 0
        %617 = vmatprep.subr.bf16.mxu0 0
        %618 = vmatpush1.bf16.msra.mxu0 0
        %619 = vmatprep.subr.bf16.mxu0 0
        %620 = vmatpush1.bf16.msra.mxu0 0
        %621 = vmatprep.subr.bf16.mxu0 0
        %622 = vmatpush1.bf16.msra.mxu0 0
        %623 = vmatprep.subr.bf16.mxu0 0
        %624 = vmatpush1.bf16.msra.mxu0 0
        %625 = vmatprep.subr.bf16.mxu0 0
        %626 = vmatpush1.bf16.msra.mxu0 0
        %627 = vmatprep.subr.bf16.mxu0 0
        %628 = vmatpush1.bf16.msra.mxu0 0
        %629 = vmatprep.subr.bf16.mxu0 0
        %630 = vmatpush1.bf16.msra.mxu0 0
        %631 = vmatprep.mubr.bf16.mxu0 0
        %632 = vmatmul.mubr.bf16.gmra.mrb[0].mxu0 %v416
        %v633 = vpop.f32.mrb[0].mxu0
        %v634 = vadd.f32 %v549, %v633
        %v635 = vpop.f32.mrb[0].mxu0
        %v636 = vpop.f32.mrb[0].mxu0
        %v637 = vpop.f32.mrb[0].mxu0
        %638 = vdwg.mxu0
        %v639 = vmul.f32 %v634, %v634
        %v640 = vmul.f32 %v634, %v639
        %v641 = vmul.f32 %v640, 0.044715
        %v642 = vadd.f32 %v634, %v641
        %v643 = vmul.f32 %v642, 0.7978846
        %v644 = vtanh.pop %v643
        %v645 = vadd.f32 %v644, 1.0
        %v646 = vmul.f32 %v645, 0.5
        %v647 = vmul.f32 %v634, %v646
        %v648 = vmul.f32 %v647, %v523
        %v649 = vld [vmem:[#allocation3] sm:$0xff]
        %v650 = vpack.c.bf16 %v648, %v648
        %v651 = vld [vmem:[#allocation10] sm:$0xf]
        %v652 = vld [vmem:[#allocation10 + $0x4] sm:$0xf]
        %v653 = vld [vmem:[#allocation10 + $0x8] sm:$0xf]
        %v654 = vld [vmem:[#allocation10 + $0xc] sm:$0xf]
        %v655 = vld [vmem:[#allocation10 + $0x10] sm:$0xf]
        %v656 = vld [vmem:[#allocation10 + $0x14] sm:$0xf]
        %v657 = vld [vmem:[#allocation10 + $0x18] sm:$0xf]
        %v658 = vld [vmem:[#allocation10 + $0x1c] sm:$0xf]
        %v659 = vld [vmem:[#allocation10 + $0x20] sm:$0xf]
        %v660 = vld [vmem:[#allocation10 + $0x24] sm:$0xf]
        %v661 = vld [vmem:[#allocation10 + $0x28] sm:$0xf]
        %v662 = vld [vmem:[#allocation10 + $0x2c] sm:$0xf]
        %v663 = vld [vmem:[#allocation10 + $0x30] sm:$0xf]
        %v664 = vld [vmem:[#allocation10 + $0x34] sm:$0xf]
        %v665 = vld [vmem:[#allocation10 + $0x38] sm:$0xf]
        %v666 = vld [vmem:[#allocation10 + $0x3c] sm:$0xf]
        %v683 = vunpack.c.l.b16 %v651
        %v684 = vunpack.c.l.b16 %v652
        %v685 = vunpack.c.l.b16 %v653
        %v686 = vunpack.c.l.b16 %v654
        %v687 = vunpack.c.l.b16 %v655
        %v688 = vunpack.c.l.b16 %v656
        %v689 = vunpack.c.l.b16 %v657
        %v690 = vunpack.c.l.b16 %v658
        %v691 = vunpack.c.l.b16 %v659
        %v692 = vunpack.c.l.b16 %v660
        %v693 = vunpack.c.l.b16 %v661
        %v694 = vunpack.c.l.b16 %v662
        %v695 = vunpack.c.l.b16 %v663
        %v696 = vunpack.c.l.b16 %v664
        %v697 = vunpack.c.l.b16 %v665
        %v698 = vunpack.c.l.b16 %v666
        %v699 = vpack.c.b16 %v684, %v683
        %v700 = vpack.c.b16 %v686, %v685
        %v701 = vpack.c.b16 %v688, %v687
        %v702 = vpack.c.b16 %v690, %v689
        %v703 = vpack.c.b16 %v692, %v691
        %v704 = vpack.c.b16 %v694, %v693
        %v705 = vpack.c.b16 %v696, %v695
        %v706 = vpack.c.b16 %v698, %v697
        %715 = vmatprep.subr.bf16.mxu0 0
        %716 = vmatpush1.bf16.msra.mxu0 %v699
        %717 = vmatprep.subr.bf16.mxu0 0
        %718 = vmatpush1.bf16.msra.mxu0 %v700
        %719 = vmatprep.subr.bf16.mxu0 0
        %720 = vmatpush1.bf16.msra.mxu0 %v701
        %721 = vmatprep.subr.bf16.mxu0 0
        %722 = vmatpush1.bf16.msra.mxu0 %v702
        %723 = vmatprep.subr.bf16.mxu0 0
        %724 = vmatpush1.bf16.msra.mxu0 %v703
        %725 = vmatprep.subr.bf16.mxu0 0
        %726 = vmatpush1.bf16.msra.mxu0 %v704
        %727 = vmatprep.subr.bf16.mxu0 0
        %728 = vmatpush1.bf16.msra.mxu0 %v705
        %729 = vmatprep.subr.bf16.mxu0 0
        %730 = vmatpush1.bf16.msra.mxu0 %v706
        %731 = vmatprep.subr.bf16.mxu0 0
        %732 = vmatpush1.bf16.msra.mxu0 0
        %733 = vmatprep.subr.bf16.mxu0 0
        %734 = vmatpush1.bf16.msra.mxu0 0
        %735 = vmatprep.subr.bf16.mxu0 0
        %736 = vmatpush1.bf16.msra.mxu0 0
        %737 = vmatprep.subr.bf16.mxu0 0
        %738 = vmatpush1.bf16.msra.mxu0 0
        %739 = vmatprep.subr.bf16.mxu0 0
        %740 = vmatpush1.bf16.msra.mxu0 0
        %741 = vmatprep.subr.bf16.mxu0 0
        %742 = vmatpush1.bf16.msra.mxu0 0
        %743 = vmatprep.subr.bf16.mxu0 0
        %744 = vmatpush1.bf16.msra.mxu0 0
        %745 = vmatprep.subr.bf16.mxu0 0
        %746 = vmatpush1.bf16.msra.mxu0 0
        %747 = vmatprep.mubr.bf16.mxu0 0
        %748 = vmatmul.mubr.bf16.gmra.mrb[0].mxu0 %v650
        %v749 = vpop.f32.mrb[0].mxu0
        %v750 = vadd.f32 0.0, %v749
        %v751 = vpop.f32.mrb[0].mxu0
        %v752 = vpop.f32.mrb[0].mxu0
        %v753 = vpop.f32.mrb[0].mxu0
        %754 = vdwg.mxu0
        %v755 = vadd.f32 %v649, %v750
        %756 = vst [vmem:[#allocation3] sm:$0xff] %v755
        // Predicated region
        $region69: #{tpu_custom_call.1} parent=47 // pred_check
          %p757 = pneg %p402
        $region70: #{tpu_custom_call.1} parent=47 // pred_check_branch
          %759 = sbr.rel (%p757) target = $region72
        $region71: #{tpu_custom_call.1} parent=47 // pred_region
          %v760 = vld [vmem:[#allocation3] sm:$0xff]
          %v761 = vld [vmem:[%s6] sm:$0x1]
          %v763 = vlaneseq
          %v764 = vshrl.u32 %v763, 7
          %v765 = vsub.s32 0, %v764
          %v766 = vrot.slane %v761, %v765
          %v768 = vadd.f32 %v760, %v766
          %769 = vst [vmem:[%s393] sm:$0xff] %v768
        $region72: #{tpu_custom_call.1} parent=47 // pred_fallthru
          _
        %s770 = sand.u32 %s223, 1
        %s771 = scalar_lea.sflag [#allocation6], %s770
        %s772 = sand.u32 %s223, 1
        %s773 = smul.addr %s772, 8
        %s774 = scalar_lea.vmem [#allocation12], %s773
        // Predicated region
        $region73: #{tpu_custom_call.1} parent=47 // pred_check
          %p775 = pneg %p233
        $region74: #{tpu_custom_call.1} parent=47 // pred_check_branch
          %777 = sbr.rel (%p775) target = $region76
        $region75: #{tpu_custom_call.1} parent=47 // pred_region
          %s779 = ssub.s32 128, 128
          %780 = vsyncadd %s771, %s779
          %s781 = smul.addr %s30, 128
          %s782 = scalar_lea.hbm %s7, %s781
          %s784 = sshll.u32 %s774, 4
          %s785 = int_to_ptr.vmem [resolvable:$true] %s784
          %787 = dma.vmem_to_hbm [thread:$0]  %s785, 128, %s782, %s771
        $region76: #{tpu_custom_call.1} parent=47 // pred_fallthru
          _
      $region48: #{tpu_custom_call.1} parent=5 // pred_fallthru
        _
      %p788 = scmp.le.s32.totalorder 2, %s21
      // Predicated region
      $region77: #{tpu_custom_call.1} parent=5 // pred_check
        %p789 = pneg %p788
      $region78: #{tpu_custom_call.1} parent=5 // pred_check_branch
        %791 = sbr.rel (%p789) target = $region80
      $region79: #{tpu_custom_call.1} parent=5 // pred_region
        %s792 = ssub.s32 %s21, 2
        // Predicated region
        $region81: #{tpu_custom_call.1} parent=79 // pred_check
          %p793 = pneg %p239
        $region82: #{tpu_custom_call.1} parent=79 // pred_check_branch
          %795 = sbr.rel (%p793) target = $region84
        $region83: #{tpu_custom_call.1} parent=79 // pred_region
          %s796 = sand.u32 %s224, 1
          %s797 = scalar_lea.sflag [#allocation6], %s796
          %s798 = sand.u32 %s224, 1
          %s799 = smul.addr %s798, 8
          %s800 = scalar_lea.vmem [#allocation12], %s799
          %801 = dma.done %s797, 128
        $region84: #{tpu_custom_call.1} parent=79 // pred_fallthru
          _
      $region80: #{tpu_custom_call.1} parent=5 // pred_fallthru
        _
    $region6: #{tpu_custom_call.1} parent=1 // loop_footer
      %s25 = sadd.s32 1, %s21
    $region7: #{tpu_custom_call.1} parent=1 // loop_footer_branch
      %20 = sbr.rel target = $region3
    $region8: #{tpu_custom_call.1} parent=1 // loop_exit
      _
    %802 = vsyncpa [#allocation5], 1
    %s803 = scalar_lea.sflag [#allocation5], 1
    %804 = vsyncpa %s803, 1
    %805 = vsyncpa [#allocation8], 1
    %806 = vsyncpa [#allocation11], 1
    %807 = vsyncpa [#allocation6], 1
    %s808 = scalar_lea.sflag [#allocation6], 1
    %809 = vsyncpa %s808, 1

// kernel: tpu_custom_call.1
$region0: #{tpu_custom_call.1}
  #allocation0 [shape = 'u32[]', space=smem, size = 0x4, offset = 0x4, fixed_abs, tag = 'smem constant byte address 0x4 - core index']
  #allocation1 [shape = 'u32[144,128]{1,0:T(1,128)}', space=vmem, size = 0x12000, scoped, tag = 'internal scratch']
  #allocation2 [shape = 'bf16[8,128]{1,0:T(8,128)(2,1)}', space=vmem, size = 0x800, scoped, tag = 'scratch operand']
  #allocation3 [shape = 'f32[8,128]{1,0:T(8,128)}', space=vmem, size = 0x1000, scoped, tag = 'scratch operand']
  %s0 = inlined_call_operand.hbm [shape: f32[16,128], index: 0, kind: input, shape index: {}]
  %s1 = inlined_call_operand.hbm [shape: bf16[128,128], index: 1, kind: input, shape index: {}]
  %s2 = inlined_call_operand.hbm [shape: bf16[128,128], index: 2, kind: input, shape index: {}]
  %s3 = inlined_call_operand.vmem [shape: f32[1,128], index: 3, kind: input, shape index: {}]
  %s4 = inlined_call_operand.vmem [shape: f32[1,128], index: 4, kind: input, shape index: {}]
  %s5 = inlined_call_operand.hbm [shape: bf16[128,128], index: 5, kind: input, shape index: {}]
  %s6 = inlined_call_operand.vmem [shape: f32[1,128], index: 6, kind: input, shape index: {}]
  %s7 = inlined_call_operand.hbm [shape: f32[16,128], index: 7, kind: output, shape index: {}]
  %s8 = sld [smem:[#allocation0]]
  $region85: #{tpu_custom_call.1} parent=0
    _
  %s10 = ssub.s32 1, %s8
  %s11 = scalar_select 0, %s10, %s8
  $region1: #{tpu_custom_call.1} parent=0
    #allocation4 [shape = 'u8[8192]{0}', space=vmem, size = 0x2000, scoped, tag = 'input window, operand 0']
    #allocation5 [shape = 's32[2]{0}', space=sflag, size = 0x8, scoped, tag = 'scoped memory for tpu_custom_call.1']
    #allocation6 [shape = 's32[2]{0}', space=sflag, size = 0x8, scoped, tag = 'scoped memory for tpu_custom_call.1']
    #allocation7 [shape = 'u8[32768]{0}', space=vmem, size = 0x8000, scoped, tag = 'input window, operand 1, single buffered']
    #allocation8 [shape = 's32[1]{0}', space=sflag, size = 0x4, scoped, tag = 'scoped memory for tpu_custom_call.1']
    #allocation9 [shape = 'u8[32768]{0}', space=vmem, size = 0x8000, scoped, tag = 'input window, operand 2, single buffered']
    #allocation10 [shape = 'u8[32768]{0}', space=vmem, size = 0x8000, scoped, tag = 'input window, operand 5, single buffered']
    #allocation11 [shape = 's32[1]{0}', space=sflag, size = 0x4, scoped, tag = 'scoped memory for tpu_custom_call.1']
    #allocation12 [shape = 'u8[8192]{0}', space=vmem, size = 0x2000, scoped, tag = 'output window, operand 0']
    %12 = vsyncpa [#allocation5], 0
    %s13 = scalar_lea.sflag [#allocation5], 1
    %14 = vsyncpa %s13, 0
    %15 = vsyncpa [#allocation8], 0
    %16 = vsyncpa [#allocation11], 0
    %17 = vsyncpa [#allocation6], 0
    %s18 = scalar_lea.sflag [#allocation6], 1
    %19 = vsyncpa %s18, 0
    loop: start=0, step=1, limit=4
    $region2: #{tpu_custom_call.1} parent=1 // loop_pre_header
      _
    $region3: #{tpu_custom_call.1} parent=1 // loop_header
      %s21 = sphi 0, %s25
      %p22 = scmp.ge.s32.totalorder %s21, 4
      %s28 = sphi 0, %s40
      %s29 = sphi 0, %s36
      %s30 = sphi 0, %s28
      %s31 = sphi 0, %s29
      %s32 = sphi 0, %s30
      %s33 = sphi 0, %s31
      %s43 = sphi 0, %s45
      %s46 = sphi 0, %s43
      %s47 = sphi 0, %s46
      %s63 = sphi 0, %s47
      %s69 = sphi 0, %s71
      %s72 = sphi 0, %s69
      %s73 = sphi 0, %s72
      %s89 = sphi 0, %s73
      %s95 = sphi 0, %s97
      %s98 = sphi 0, %s95
      %s99 = sphi 0, %s98
      %s115 = sphi 0, %s99
      %s121 = sphi 0, %s123
      %s124 = sphi 0, %s121
      %s125 = sphi 0, %s124
      %s141 = sphi 0, %s125
      %s147 = sphi 0, %s149
      %s150 = sphi 0, %s147
      %s151 = sphi 0, %s150
      %s167 = sphi 0, %s151
      %s173 = sphi 0, %s175
      %s176 = sphi 0, %s173
      %s177 = sphi 0, %s176
      %s193 = sphi 0, %s177
      %s197 = sphi 0, %s197
      %s199 = sphi 0, %s197
      %s200 = sphi 0, %s199
      %s214 = sphi 0, %s200
      %s220 = sphi 0, %s222
      %s223 = sphi 0, %s220
      %s224 = sphi 0, %s223
      %s240 = sphi 0, %s224
    $region4: #{tpu_custom_call.1} parent=1 // loop_header_branch
      %24 = sbr.rel (%p22) target = $region8
    $region5: #{tpu_custom_call.1} parent=1 // loop_body
      %s26 = ssub.s32 %s21, 1
      %s27 = ssub.s32 %s21, 2
      %s34 = sadd.s32 1, %s29
      %p35 = scmp.ge.s32.totalorder %s34, 1
      %s36 = scalar_select %p35, 0, %s34
      %s37 = sadd.s32 1, %s28
      %s38 = scalar_select %p35, %s37, %s28
      %p39 = scmp.ge.s32.totalorder %s38, 2
      %s40 = scalar_select %p39, 0, %s38
      %s41 = ssub.s32 %s28, %s40
      %p42 = scmp.eq.s32.totalorder %s41, 0
      %s44 = sadd.s32 %s43, 1
      %s45 = scalar_select %p42, %s43, %s44
      %p48 = pneg %p42
      %p49 = scmp.eq.s32.totalorder %s21, 1
      %p50 = por %p48, %p49
      %p51 = scmp.ne.s32.totalorder %s43, %s46
      %p52 = scmp.eq.s32.totalorder %s21, 0
      %p53 = por %p51, %p52
      %p54 = scmp.ne.s32.totalorder %s43, %s46
      %p55 = scmp.eq.s32.totalorder %s26, 1
      %p56 = por %p54, %p55
      %p57 = scmp.ne.s32.totalorder %s46, %s47
      %p58 = scmp.eq.s32.totalorder %s26, 0
      %p59 = por %p57, %p58
      %p60 = scmp.ne.s32.totalorder %s46, %s47
      %p61 = scmp.eq.s32.totalorder %s27, 1
      %p62 = por %p60, %p61
      %p64 = scmp.ne.s32.totalorder %s47, %s63
      %p65 = scmp.eq.s32.totalorder %s27, 0
      %p66 = por %p64, %p65
      %s67 = ssub.s32 %s29, %s36
      %p68 = scmp.eq.s32.totalorder %s67, 0
      %s70 = sadd.s32 %s69, 1
      %s71 = scalar_select %p68, %s69, %s70
      %p74 = pneg %p68
      %p75 = scmp.eq.s32.totalorder %s21, 1
      %p76 = por %p74, %p75
      %p77 = scmp.ne.s32.totalorder %s69, %s72
      %p78 = scmp.eq.s32.totalorder %s21, 0
      %p79 = por %p77, %p78
      %p80 = scmp.ne.s32.totalorder %s69, %s72
      %p81 = scmp.eq.s32.totalorder %s26, 1
      %p82 = por %p80, %p81
      %p83 = scmp.ne.s32.totalorder %s72, %s73
      %p84 = scmp.eq.s32.totalorder %s26, 0
      %p85 = por %p83, %p84
      %p86 = scmp.ne.s32.totalorder %s72, %s73
      %p87 = scmp.eq.s32.totalorder %s27, 1
      %p88 = por %p86, %p87
      %p90 = scmp.ne.s32.totalorder %s73, %s89
      %p91 = scmp.eq.s32.totalorder %s27, 0
      %p92 = por %p90, %p91
      %s93 = ssub.s32 %s29, %s36
      %p94 = scmp.eq.s32.totalorder %s93, 0
      %s96 = sadd.s32 %s95, 1
      %s97 = scalar_select %p94, %s95, %s96
      %p100 = pneg %p94
      %p101 = scmp.eq.s32.totalorder %s21, 1
      %p102 = por %p100, %p101
      %p103 = scmp.ne.s32.totalorder %s95, %s98
      %p104 = scmp.eq.s32.totalorder %s21, 0
      %p105 = por %p103, %p104
      %p106 = scmp.ne.s32.totalorder %s95, %s98
      %p107 = scmp.eq.s32.totalorder %s26, 1
      %p108 = por %p106, %p107
      %p109 = scmp.ne.s32.totalorder %s98, %s99
      %p110 = scmp.eq.s32.totalorder %s26, 0
      %p111 = por %p109, %p110
      %p112 = scmp.ne.s32.totalorder %s98, %s99
      %p113 = scmp.eq.s32.totalorder %s27, 1
      %p114 = por %p112, %p113
      %p116 = scmp.ne.s32.totalorder %s99, %s115
      %p117 = scmp.eq.s32.totalorder %s27, 0
      %p118 = por %p116, %p117
      %s119 = ssub.s32 %s29, %s36
      %p120 = scmp.eq.s32.totalorder %s119, 0
      %s122 = sadd.s32 %s121, 1
      %s123 = scalar_select %p120, %s121, %s122
      %p126 = pneg %p120
      %p127 = scmp.eq.s32.totalorder %s21, 1
      %p128 = por %p126, %p127
      %p129 = scmp.ne.s32.totalorder %s121, %s124
      %p130 = scmp.eq.s32.totalorder %s21, 0
      %p131 = por %p129, %p130
      %p132 = scmp.ne.s32.totalorder %s121, %s124
      %p133 = scmp.eq.s32.totalorder %s26, 1
      %p134 = por %p132, %p133
      %p135 = scmp.ne.s32.totalorder %s124, %s125
      %p136 = scmp.eq.s32.totalorder %s26, 0
      %p137 = por %p135, %p136
      %p138 = scmp.ne.s32.totalorder %s124, %s125
      %p139 = scmp.eq.s32.totalorder %s27, 1
      %p140 = por %p138, %p139
      %p142 = scmp.ne.s32.totalorder %s125, %s141
      %p143 = scmp.eq.s32.totalorder %s27, 0
      %p144 = por %p142, %p143
      %s145 = ssub.s32 %s29, %s36
      %p146 = scmp.eq.s32.totalorder %s145, 0
      %s148 = sadd.s32 %s147, 1
      %s149 = scalar_select %p146, %s147, %s148
      %p152 = pneg %p146
      %p153 = scmp.eq.s32.totalorder %s21, 1
      %p154 = por %p152, %p153
      %p155 = scmp.ne.s32.totalorder %s147, %s150
      %p156 = scmp.eq.s32.totalorder %s21, 0
      %p157 = por %p155, %p156
      %p158 = scmp.ne.s32.totalorder %s147, %s150
      %p159 = scmp.eq.s32.totalorder %s26, 1
      %p160 = por %p158, %p159
      %p161 = scmp.ne.s32.totalorder %s150, %s151
      %p162 = scmp.eq.s32.totalorder %s26, 0
      %p163 = por %p161, %p162
      %p164 = scmp.ne.s32.totalorder %s150, %s151
      %p165 = scmp.eq.s32.totalorder %s27, 1
      %p166 = por %p164, %p165
      %p168 = scmp.ne.s32.totalorder %s151, %s167
      %p169 = scmp.eq.s32.totalorder %s27, 0
      %p170 = por %p168, %p169
      %s171 = ssub.s32 %s29, %s36
      %p172 = scmp.eq.s32.totalorder %s171, 0
      %s174 = sadd.s32 %s173, 1
      %s175 = scalar_select %p172, %s173, %s174
      %p178 = pneg %p172
      %p179 = scmp.eq.s32.totalorder %s21, 1
      %p180 = por %p178, %p179
      %p181 = scmp.ne.s32.totalorder %s173, %s176
      %p182 = scmp.eq.s32.totalorder %s21, 0
      %p183 = por %p181, %p182
      %p184 = scmp.ne.s32.totalorder %s173, %s176
      %p185 = scmp.eq.s32.totalorder %s26, 1
      %p186 = por %p184, %p185
      %p187 = scmp.ne.s32.totalorder %s176, %s177
      %p188 = scmp.eq.s32.totalorder %s26, 0
      %p189 = por %p187, %p188
      %p190 = scmp.ne.s32.totalorder %s176, %s177
      %p191 = scmp.eq.s32.totalorder %s27, 1
      %p192 = por %p190, %p191
      %p194 = scmp.ne.s32.totalorder %s177, %s193
      %p195 = scmp.eq.s32.totalorder %s27, 0
      %p196 = por %p194, %p195
      %s198 = sadd.s32 %s197, 1
      %p201 = scmp.eq.s32.totalorder %s21, 1
      %p202 = scmp.ne.s32.totalorder %s197, %s199
      %p203 = scmp.eq.s32.totalorder %s21, 0
      %p204 = por %p202, %p203
      %p205 = scmp.ne.s32.totalorder %s197, %s199
      %p206 = scmp.eq.s32.totalorder %s26, 1
      %p207 = por %p205, %p206
      %p208 = scmp.ne.s32.totalorder %s199, %s200
      %p209 = scmp.eq.s32.totalorder %s26, 0
      %p210 = por %p208, %p209
      %p211 = scmp.ne.s32.totalorder %s199, %s200
      %p212 = scmp.eq.s32.totalorder %s27, 1
      %p213 = por %p211, %p212
      %p215 = scmp.ne.s32.totalorder %s200, %s214
      %p216 = scmp.eq.s32.totalorder %s27, 0
      %p217 = por %p215, %p216
      %s218 = ssub.s32 %s28, %s40
      %p219 = scmp.eq.s32.totalorder %s218, 0
      %s221 = sadd.s32 %s220, 1
      %s222 = scalar_select %p219, %s220, %s221
      %p225 = pneg %p219
      %p226 = scmp.eq.s32.totalorder %s21, 1
      %p227 = por %p225, %p226
      %p228 = scmp.ne.s32.totalorder %s220, %s223
      %p229 = scmp.eq.s32.totalorder %s21, 0
      %p230 = por %p228, %p229
      %p231 = scmp.ne.s32.totalorder %s220, %s223
      %p232 = scmp.eq.s32.totalorder %s26, 1
      %p233 = por %p231, %p232
      %p234 = scmp.ne.s32.totalorder %s223, %s224
      %p235 = scmp.eq.s32.totalorder %s26, 0
      %p236 = por %p234, %p235
      %p237 = scmp.ne.s32.totalorder %s223, %s224
      %p238 = scmp.eq.s32.totalorder %s27, 1
      %p239 = por %p237, %p238
      %p241 = scmp.ne.s32.totalorder %s224, %s240
      %p242 = scmp.eq.s32.totalorder %s27, 0
      %p243 = por %p241, %p242
      %p244 = scmp.le.s32.totalorder 1, %s21
      %p245 = scmp.lt.s32.totalorder %s21, 3
      %p246 = pnand %p244, %p245
      %p247 = pneg %p246
      // Predicated region
      $region9: #{tpu_custom_call.1} parent=5 // pred_check
        _
      $region10: #{tpu_custom_call.1} parent=5 // pred_check_branch
        %249 = sbr.rel (%p246) target = $region12
      $region11: #{tpu_custom_call.1} parent=5 // pred_region
        %s250 = ssub.s32 %s21, 1
        // Predicated region
        $region13: #{tpu_custom_call.1} parent=11 // pred_check
          %p251 = pneg %p85
        $region14: #{tpu_custom_call.1} parent=11 // pred_check_branch
          %253 = sbr.rel (%p251) target = $region16
        $region15: #{tpu_custom_call.1} parent=11 // pred_region
          %s255 = ssub.s32 1024, 1024
          %256 = vsyncadd [#allocation8], %s255
          %s257 = smul.addr %s31, 64
          %s258 = scalar_lea.hbm %s1, %s257
          %s259 = sshll.u32 [#allocation7], 4
          %s260 = int_to_ptr.vmem [resolvable:$true] %s259
          %265 = dma.hbm_to_vmem [thread:$0]  %s258, 1024, %s260, [#allocation8], 64, 64, 4
        $region16: #{tpu_custom_call.1} parent=11 // pred_fallthru
          _
        // Predicated region
        $region17: #{tpu_custom_call.1} parent=11 // pred_check
          %p266 = pneg %p111
        $region18: #{tpu_custom_call.1} parent=11 // pred_check_branch
          %268 = sbr.rel (%p266) target = $region20
        $region19: #{tpu_custom_call.1} parent=11 // pred_region
          %s270 = ssub.s32 1024, 1024
          %271 = vsyncadd [#allocation8], %s270
          %s272 = smul.addr %s31, 64
          %s273 = scalar_lea.hbm %s2, %s272
          %s274 = sshll.u32 [#allocation9], 4
          %s275 = int_to_ptr.vmem [resolvable:$true] %s274
          %280 = dma.hbm_to_vmem [thread:$0]  %s273, 1024, %s275, [#allocation8], 64, 64, 4
        $region20: #{tpu_custom_call.1} parent=11 // pred_fallthru
          _
        // Predicated region
        $region21: #{tpu_custom_call.1} parent=11 // pred_check
          %p281 = pneg %p137
        $region22: #{tpu_custom_call.1} parent=11 // pred_check_branch
          %283 = sbr.rel (%p281) target = $region24
        $region23: #{tpu_custom_call.1} parent=11 // pred_region
          %p284 = scmp.lt.s32.totalorder %s31, 0
          %s285 = scalar_select %p284, %s31, 0
          %s286 = scalar_lea.vmem %s3, %s285
        $region24: #{tpu_custom_call.1} parent=11 // pred_fallthru
          _
        // Predicated region
        $region25: #{tpu_custom_call.1} parent=11 // pred_check
          %p287 = pneg %p163
        $region26: #{tpu_custom_call.1} parent=11 // pred_check_branch
          %289 = sbr.rel (%p287) target = $region28
        $region27: #{tpu_custom_call.1} parent=11 // pred_region
          %p290 = scmp.lt.s32.totalorder %s31, 0
          %s291 = scalar_select %p290, %s31, 0
          %s292 = scalar_lea.vmem %s4, %s291
        $region28: #{tpu_custom_call.1} parent=11 // pred_fallthru
          _
        // Predicated region
        $region29: #{tpu_custom_call.1} parent=11 // pred_check
          %p293 = pneg %p189
        $region30: #{tpu_custom_call.1} parent=11 // pred_check_branch
          %295 = sbr.rel (%p293) target = $region32
        $region31: #{tpu_custom_call.1} parent=11 // pred_region
          %s296 = smul.u32 16, %s31
          %s298 = ssub.s32 1024, 1024
          %299 = vsyncadd [#allocation11], %s298
          %s300 = smul.addr %s296, 64
          %s301 = scalar_lea.hbm %s5, %s300
          %s302 = sshll.u32 [#allocation10], 4
          %s303 = int_to_ptr.vmem [resolvable:$true] %s302
          %308 = dma.hbm_to_vmem [thread:$0]  %s301, 1024, %s303, [#allocation11], 64, 64, 4
        $region32: #{tpu_custom_call.1} parent=11 // pred_fallthru
          _
        // Predicated region
        $region33: #{tpu_custom_call.1} parent=11 // pred_check
          %p309 = pneg %p210
        $region34: #{tpu_custom_call.1} parent=11 // pred_check_branch
          %311 = sbr.rel (%p309) target = $region36
        $region35: #{tpu_custom_call.1} parent=11 // pred_region
          _
        $region36: #{tpu_custom_call.1} parent=11 // pred_fallthru
          _
      $region12: #{tpu_custom_call.1} parent=5 // pred_fallthru
        _
      %p312 = scmp.lt.s32.totalorder %s21, 2
      // Predicated region
      $region37: #{tpu_custom_call.1} parent=5 // pred_check
        %p313 = pneg %p312
      $region38: #{tpu_custom_call.1} parent=5 // pred_check_branch
        %315 = sbr.rel (%p313) target = $region40
      $region39: #{tpu_custom_call.1} parent=5 // pred_region
        // Predicated region
        $region41: #{tpu_custom_call.1} parent=39 // pred_check
          %p316 = pneg %p53
        $region42: #{tpu_custom_call.1} parent=39 // pred_check_branch
          %318 = sbr.rel (%p316) target = $region44
        $region43: #{tpu_custom_call.1} parent=39 // pred_region
          %s319 = sand.u32 %s43, 1
          %s320 = scalar_lea.sflag [#allocation5], %s319
          %s321 = sand.u32 %s43, 1
          %s322 = smul.addr %s321, 8
          %s323 = scalar_lea.vmem [#allocation4], %s322
          %s325 = ssub.s32 128, 128
          %326 = vsyncadd %s320, %s325
          %s327 = smul.addr %s28, 128
          %s328 = scalar_lea.hbm %s0, %s327
          %s330 = sshll.u32 %s323, 4
          %s331 = int_to_ptr.vmem [resolvable:$true] %s330
          %333 = dma.hbm_to_vmem [thread:$0]  %s328, 128, %s331, %s320
        $region44: #{tpu_custom_call.1} parent=39 // pred_fallthru
          _
      $region40: #{tpu_custom_call.1} parent=5 // pred_fallthru
        _
      %p334 = scmp.le.s32.totalorder 1, %s21
      %p335 = scmp.lt.s32.totalorder %s21, 3
      %p336 = pnand %p334, %p335
      %p337 = pneg %p336
      // Predicated region
      $region45: #{tpu_custom_call.1} parent=5 // pred_check
        _
      $region46: #{tpu_custom_call.1} parent=5 // pred_check_branch
        %339 = sbr.rel (%p336) target = $region48
      $region47: #{tpu_custom_call.1} parent=5 // pred_region
        %s340 = ssub.s32 %s21, 1
        %s341 = sand.u32 %s46, 1
        %s342 = scalar_lea.sflag [#allocation5], %s341
        %s343 = sand.u32 %s46, 1
        %s344 = smul.addr %s343, 8
        %s345 = scalar_lea.vmem [#allocation4], %s344
        // Predicated region
        $region49: #{tpu_custom_call.1} parent=47 // pred_check
          %p346 = pneg %p59
        $region50: #{tpu_custom_call.1} parent=47 // pred_check_branch
          %348 = sbr.rel (%p346) target = $region52
        $region51: #{tpu_custom_call.1} parent=47 // pred_region
          %349 = dma.done %s342, 128
        $region52: #{tpu_custom_call.1} parent=47 // pred_fallthru
          _
        // Predicated region
        $region53: #{tpu_custom_call.1} parent=47 // pred_check
          %p350 = pneg %p85
        $region54: #{tpu_custom_call.1} parent=47 // pred_check_branch
          %352 = sbr.rel (%p350) target = $region56
        $region55: #{tpu_custom_call.1} parent=47 // pred_region
          %353 = dma.done [#allocation8], 1024
        $region56: #{tpu_custom_call.1} parent=47 // pred_fallthru
          _
        // Predicated region
        $region57: #{tpu_custom_call.1} parent=47 // pred_check
          %p354 = pneg %p111
        $region58: #{tpu_custom_call.1} parent=47 // pred_check_branch
          %356 = sbr.rel (%p354) target = $region60
        $region59: #{tpu_custom_call.1} parent=47 // pred_region
          %357 = dma.done [#allocation8], 1024
        $region60: #{tpu_custom_call.1} parent=47 // pred_fallthru
          _
        // Predicated region
        $region61: #{tpu_custom_call.1} parent=47 // pred_check
          %p358 = pneg %p189
        $region62: #{tpu_custom_call.1} parent=47 // pred_check_branch
          %360 = sbr.rel (%p358) target = $region64
        $region63: #{tpu_custom_call.1} parent=47 // pred_region
          %361 = dma.done [#allocation11], 1024
        $region64: #{tpu_custom_call.1} parent=47 // pred_fallthru
          _
        %s362 = sand.u32 %s46, 1
        %s363 = scalar_lea.sflag [#allocation5], %s362
        %s364 = sand.u32 %s46, 1
        %s365 = smul.addr %s364, 8
        %s366 = scalar_lea.vmem [#allocation4], %s365
        %p367 = pneg %p59
        %p368 = pneg %p56
        %p369 = pneg %p85
        %p370 = pneg %p82
        %p371 = pneg %p111
        %p372 = pneg %p108
        %p373 = scmp.lt.s32.totalorder %s31, 0
        %s374 = scalar_select %p373, %s31, 0
        %s375 = scalar_lea.vmem %s3, %s374
        %p376 = pneg %p137
        %p377 = pneg %p134
        %p378 = scmp.lt.s32.totalorder %s31, 0
        %s379 = scalar_select %p378, %s31, 0
        %s380 = scalar_lea.vmem %s4, %s379
        %p381 = pneg %p163
        %p382 = pneg %p160
        %p383 = pneg %p189
        %p384 = pneg %p186
        %p385 = pneg %p210
        %p386 = pneg %p207
        %p387 = pneg %p236
        %p388 = pneg %p233
        %s389 = sand.u32 %s223, 1
        %s390 = scalar_lea.sflag [#allocation6], %s389
        %s391 = sand.u32 %s223, 1
        %s392 = smul.addr %s391, 8
        %s393 = scalar_lea.vmem [#allocation12], %s392
        %p394 = scmp.lt.s32.totalorder %s31, 0
        %s395 = scalar_select %p394, %s31, 0
        %s396 = scalar_lea.vmem %s3, %s395
        %p397 = scmp.lt.s32.totalorder %s31, 0
        %s398 = scalar_select %p397, %s31, 0
        %s399 = scalar_lea.vmem %s4, %s398
        %s400 = smul.u32 16, %s31
        %p402 = scmp.eq.s32.totalorder %s31, 0
        // Predicated region
        $region65: #{tpu_custom_call.1} parent=47 // pred_check
          %p403 = pneg %p402
        $region66: #{tpu_custom_call.1} parent=47 // pred_check_branch
          %405 = sbr.rel (%p403) target = $region68
        $region67: #{tpu_custom_call.1} parent=47 // pred_region
          %v406 = vld [vmem:[%s345] sm:$0xff]
          %v407 = vmul.f32 %v406, %v406
          %408 = vadd.xlane.f32.xlu0 %v407
          %v409 = vpop.xlane.xlu0 %408
          %v410 = vmax.f32 %v409, 1e-24
          %v411 = vrsqrt.pop %v410
          %v412 = vmul.f32 %v406, %v411
          %v413 = vpack.c.bf16 %v412, %v412
          %414 = vst [vmem:[#allocation2] sm:$0xf] %v413
          %415 = vst [vmem:[#allocation3] sm:$0xff] 0.0
        $region68: #{tpu_custom_call.1} parent=47 // pred_fallthru
          _
        %v416 = vld [vmem:[#allocation2] sm:$0xf]
        %v417 = vld [vmem:[#allocation7] sm:$0xf]
        %v418 = vld [vmem:[#allocation7 + $0x4] sm:$0xf]
        %v419 = vld [vmem:[#allocation7 + $0x8] sm:$0xf]
        %v420 = vld [vmem:[#allocation7 + $0xc] sm:$0xf]
        %v421 = vld [vmem:[#allocation7 + $0x10] sm:$0xf]
        %v422 = vld [vmem:[#allocation7 + $0x14] sm:$0xf]
        %v423 = vld [vmem:[#allocation7 + $0x18] sm:$0xf]
        %v424 = vld [vmem:[#allocation7 + $0x1c] sm:$0xf]
        %v425 = vld [vmem:[#allocation7 + $0x20] sm:$0xf]
        %v426 = vld [vmem:[#allocation7 + $0x24] sm:$0xf]
        %v427 = vld [vmem:[#allocation7 + $0x28] sm:$0xf]
        %v428 = vld [vmem:[#allocation7 + $0x2c] sm:$0xf]
        %v429 = vld [vmem:[#allocation7 + $0x30] sm:$0xf]
        %v430 = vld [vmem:[#allocation7 + $0x34] sm:$0xf]
        %v431 = vld [vmem:[#allocation7 + $0x38] sm:$0xf]
        %v432 = vld [vmem:[#allocation7 + $0x3c] sm:$0xf]
        %v433 = vld [vmem:[%s396] sm:$0x1]
        %v435 = vlaneseq
        %v436 = vshrl.u32 %v435, 7
        %v437 = vsub.s32 0, %v436
        %v438 = vrot.slane %v433, %v437
        %v456 = vunpack.c.l.b16 %v417
        %v457 = vunpack.c.l.b16 %v418
        %v458 = vunpack.c.l.b16 %v419
        %v459 = vunpack.c.l.b16 %v420
        %v460 = vunpack.c.l.b16 %v421
        %v461 = vunpack.c.l.b16 %v422
        %v462 = vunpack.c.l.b16 %v423
        %v463 = vunpack.c.l.b16 %v424
        %v464 = vunpack.c.l.b16 %v425
        %v465 = vunpack.c.l.b16 %v426
        %v466 = vunpack.c.l.b16 %v427
        %v467 = vunpack.c.l.b16 %v428
        %v468 = vunpack.c.l.b16 %v429
        %v469 = vunpack.c.l.b16 %v430
        %v470 = vunpack.c.l.b16 %v431
        %v471 = vunpack.c.l.b16 %v432
        %v472 = vpack.c.b16 %v457, %v456
        %v473 = vpack.c.b16 %v459, %v458
        %v474 = vpack.c.b16 %v461, %v460
        %v475 = vpack.c.b16 %v463, %v462
        %v476 = vpack.c.b16 %v465, %v464
        %v477 = vpack.c.b16 %v467, %v466
        %v478 = vpack.c.b16 %v469, %v468
        %v479 = vpack.c.b16 %v471, %v470
        %488 = vmatprep.subr.bf16.mxu0 0
        %489 = vmatpush1.bf16.msra.mxu0 %v472
        %490 = vmatprep.subr.bf16.mxu0 0
        %491 = vmatpush1.bf16.msra.mxu0 %v473
        %492 = vmatprep.subr.bf16.mxu0 0
        %493 = vmatpush1.bf16.msra.mxu0 %v474
        %494 = vmatprep.subr.bf16.mxu0 0
        %495 = vmatpush1.bf16.msra.mxu0 %v475
        %496 = vmatprep.subr.bf16.mxu0 0
        %497 = vmatpush1.bf16.msra.mxu0 %v476
        %498 = vmatprep.subr.bf16.mxu0 0
        %499 = vmatpush1.bf16.msra.mxu0 %v477
        %500 = vmatprep.subr.bf16.mxu0 0
        %501 = vmatpush1.bf16.msra.mxu0 %v478
        %502 = vmatprep.subr.bf16.mxu0 0
        %503 = vmatpush1.bf16.msra.mxu0 %v479
        %504 = vmatprep.subr.bf16.mxu0 0
        %505 = vmatpush1.bf16.msra.mxu0 0
        %506 = vmatprep.subr.bf16.mxu0 0
        %507 = vmatpush1.bf16.msra.mxu0 0
        %508 = vmatprep.subr.bf16.mxu0 0
        %509 = vmatpush1.bf16.msra.mxu0 0
        %510 = vmatprep.subr.bf16.mxu0 0
        %511 = vmatpush1.bf16.msra.mxu0 0
        %512 = vmatprep.subr.bf16.mxu0 0
        %513 = vmatpush1.bf16.msra.mxu0 0
        %514 = vmatprep.subr.bf16.mxu0 0
        %515 = vmatpush1.bf16.msra.mxu0 0
        %516 = vmatprep.subr.bf16.mxu0 0
        %517 = vmatpush1.bf16.msra.mxu0 0
        %518 = vmatprep.subr.bf16.mxu0 0
        %519 = vmatpush1.bf16.msra.mxu0 0
        %520 = vmatprep.mubr.bf16.mxu0 0
        %521 = vmatmul.mubr.bf16.gmra.mrb[0].mxu0 %v416
        %v522 = vpop.f32.mrb[0].mxu0
        %v523 = vadd.f32 %v438, %v522
        %v524 = vpop.f32.mrb[0].mxu0
        %v525 = vpop.f32.mrb[0].mxu0
        %v526 = vpop.f32.mrb[0].mxu0
        %527 = vdwg.mxu0
        %v528 = vld [vmem:[#allocation9] sm:$0xf]
        %v529 = vld [vmem:[#allocation9 + $0x4] sm:$0xf]
        %v530 = vld [vmem:[#allocation9 + $0x8] sm:$0xf]
        %v531 = vld [vmem:[#allocation9 + $0xc] sm:$0xf]
        %v532 = vld [vmem:[#allocation9 + $0x10] sm:$0xf]
        %v533 = vld [vmem:[#allocation9 + $0x14] sm:$0xf]
        %v534 = vld [vmem:[#allocation9 + $0x18] sm:$0xf]
        %v535 = vld [vmem:[#allocation9 + $0x1c] sm:$0xf]
        %v536 = vld [vmem:[#allocation9 + $0x20] sm:$0xf]
        %v537 = vld [vmem:[#allocation9 + $0x24] sm:$0xf]
        %v538 = vld [vmem:[#allocation9 + $0x28] sm:$0xf]
        %v539 = vld [vmem:[#allocation9 + $0x2c] sm:$0xf]
        %v540 = vld [vmem:[#allocation9 + $0x30] sm:$0xf]
        %v541 = vld [vmem:[#allocation9 + $0x34] sm:$0xf]
        %v542 = vld [vmem:[#allocation9 + $0x38] sm:$0xf]
        %v543 = vld [vmem:[#allocation9 + $0x3c] sm:$0xf]
        %v544 = vld [vmem:[%s399] sm:$0x1]
        %v546 = vlaneseq
        %v547 = vshrl.u32 %v546, 7
        %v548 = vsub.s32 0, %v547
        %v549 = vrot.slane %v544, %v548
        %v567 = vunpack.c.l.b16 %v528
        %v568 = vunpack.c.l.b16 %v529
        %v569 = vunpack.c.l.b16 %v530
        %v570 = vunpack.c.l.b16 %v531
        %v571 = vunpack.c.l.b16 %v532
        %v572 = vunpack.c.l.b16 %v533
        %v573 = vunpack.c.l.b16 %v534
        %v574 = vunpack.c.l.b16 %v535
        %v575 = vunpack.c.l.b16 %v536
        %v576 = vunpack.c.l.b16 %v537
        %v577 = vunpack.c.l.b16 %v538
        %v578 = vunpack.c.l.b16 %v539
        %v579 = vunpack.c.l.b16 %v540
        %v580 = vunpack.c.l.b16 %v541
        %v581 = vunpack.c.l.b16 %v542
        %v582 = vunpack.c.l.b16 %v543
        %v583 = vpack.c.b16 %v568, %v567
        %v584 = vpack.c.b16 %v570, %v569
        %v585 = vpack.c.b16 %v572, %v571
        %v586 = vpack.c.b16 %v574, %v573
        %v587 = vpack.c.b16 %v576, %v575
        %v588 = vpack.c.b16 %v578, %v577
        %v589 = vpack.c.b16 %v580, %v579
        %v590 = vpack.c.b16 %v582, %v581
        %599 = vmatprep.subr.bf16.mxu0 0
        %600 = vmatpush1.bf16.msra.mxu0 %v583
        %601 = vmatprep.subr.bf16.mxu0 0
        %602 = vmatpush1.bf16.msra.mxu0 %v584
        %603 = vmatprep.subr.bf16.mxu0 0
        %604 = vmatpush1.bf16.msra.mxu0 %v585
        %605 = vmatprep.subr.bf16.mxu0 0
        %606 = vmatpush1.bf16.msra.mxu0 %v586
        %607 = vmatprep.subr.bf16.mxu0 0
        %608 = vmatpush1.bf16.msra.mxu0 %v587
        %609 = vmatprep.subr.bf16.mxu0 0
        %610 = vmatpush1.bf16.msra.mxu0 %v588
        %611 = vmatprep.subr.bf16.mxu0 0
        %612 = vmatpush1.bf16.msra.mxu0 %v589
        %613 = vmatprep.subr.bf16.mxu0 0
        %614 = vmatpush1.bf16.msra.mxu0 %v590
        %615 = vmatprep.subr.bf16.mxu0 0
        %616 = vmatpush1.bf16.msra.mxu0 0
        %617 = vmatprep.subr.bf16.mxu0 0
        %618 = vmatpush1.bf16.msra.mxu0 0
        %619 = vmatprep.subr.bf16.mxu0 0
        %620 = vmatpush1.bf16.msra.mxu0 0
        %621 = vmatprep.subr.bf16.mxu0 0
        %622 = vmatpush1.bf16.msra.mxu0 0
        %623 = vmatprep.subr.bf16.mxu0 0
        %624 = vmatpush1.bf16.msra.mxu0 0
        %625 = vmatprep.subr.bf16.mxu0 0
        %626 = vmatpush1.bf16.msra.mxu0 0
        %627 = vmatprep.subr.bf16.mxu0 0
        %628 = vmatpush1.bf16.msra.mxu0 0
        %629 = vmatprep.subr.bf16.mxu0 0
        %630 = vmatpush1.bf16.msra.mxu0 0
        %631 = vmatprep.mubr.bf16.mxu0 0
        %632 = vmatmul.mubr.bf16.gmra.mrb[0].mxu0 %v416
        %v633 = vpop.f32.mrb[0].mxu0
        %v634 = vadd.f32 %v549, %v633
        %v635 = vpop.f32.mrb[0].mxu0
        %v636 = vpop.f32.mrb[0].mxu0
        %v637 = vpop.f32.mrb[0].mxu0
        %638 = vdwg.mxu0
        %v639 = vmul.f32 %v634, %v634
        %v640 = vmul.f32 %v634, %v639
        %v641 = vmul.f32 %v640, 0.044715
        %v642 = vadd.f32 %v634, %v641
        %v643 = vmul.f32 %v642, 0.7978846
        %v644 = vtanh.pop %v643
        %v645 = vadd.f32 %v644, 1.0
        %v646 = vmul.f32 %v645, 0.5
        %v647 = vmul.f32 %v634, %v646
        %v648 = vmul.f32 %v647, %v523
        %v649 = vld [vmem:[#allocation3] sm:$0xff]
        %v650 = vpack.c.bf16 %v648, %v648
        %v651 = vld [vmem:[#allocation10] sm:$0xf]
        %v652 = vld [vmem:[#allocation10 + $0x4] sm:$0xf]
        %v653 = vld [vmem:[#allocation10 + $0x8] sm:$0xf]
        %v654 = vld [vmem:[#allocation10 + $0xc] sm:$0xf]
        %v655 = vld [vmem:[#allocation10 + $0x10] sm:$0xf]
        %v656 = vld [vmem:[#allocation10 + $0x14] sm:$0xf]
        %v657 = vld [vmem:[#allocation10 + $0x18] sm:$0xf]
        %v658 = vld [vmem:[#allocation10 + $0x1c] sm:$0xf]
        %v659 = vld [vmem:[#allocation10 + $0x20] sm:$0xf]
        %v660 = vld [vmem:[#allocation10 + $0x24] sm:$0xf]
        %v661 = vld [vmem:[#allocation10 + $0x28] sm:$0xf]
        %v662 = vld [vmem:[#allocation10 + $0x2c] sm:$0xf]
        %v663 = vld [vmem:[#allocation10 + $0x30] sm:$0xf]
        %v664 = vld [vmem:[#allocation10 + $0x34] sm:$0xf]
        %v665 = vld [vmem:[#allocation10 + $0x38] sm:$0xf]
        %v666 = vld [vmem:[#allocation10 + $0x3c] sm:$0xf]
        %v683 = vunpack.c.l.b16 %v651
        %v684 = vunpack.c.l.b16 %v652
        %v685 = vunpack.c.l.b16 %v653
        %v686 = vunpack.c.l.b16 %v654
        %v687 = vunpack.c.l.b16 %v655
        %v688 = vunpack.c.l.b16 %v656
        %v689 = vunpack.c.l.b16 %v657
        %v690 = vunpack.c.l.b16 %v658
        %v691 = vunpack.c.l.b16 %v659
        %v692 = vunpack.c.l.b16 %v660
        %v693 = vunpack.c.l.b16 %v661
        %v694 = vunpack.c.l.b16 %v662
        %v695 = vunpack.c.l.b16 %v663
        %v696 = vunpack.c.l.b16 %v664
        %v697 = vunpack.c.l.b16 %v665
        %v698 = vunpack.c.l.b16 %v666
        %v699 = vpack.c.b16 %v684, %v683
        %v700 = vpack.c.b16 %v686, %v685
        %v701 = vpack.c.b16 %v688, %v687
        %v702 = vpack.c.b16 %v690, %v689
        %v703 = vpack.c.b16 %v692, %v691
        %v704 = vpack.c.b16 %v694, %v693
        %v705 = vpack.c.b16 %v696, %v695
        %v706 = vpack.c.b16 %v698, %v697
        %715 = vmatprep.subr.bf16.mxu0 0
        %716 = vmatpush1.bf16.msra.mxu0 %v699
        %717 = vmatprep.subr.bf16.mxu0 0
        %718 = vmatpush1.bf16.msra.mxu0 %v700
        %719 = vmatprep.subr.bf16.mxu0 0
        %720 = vmatpush1.bf16.msra.mxu0 %v701
        %721 = vmatprep.subr.bf16.mxu0 0
        %722 = vmatpush1.bf16.msra.mxu0 %v702
        %723 = vmatprep.subr.bf16.mxu0 0
        %724 = vmatpush1.bf16.msra.mxu0 %v703
        %725 = vmatprep.subr.bf16.mxu0 0
        %726 = vmatpush1.bf16.msra.mxu0 %v704
        %727 = vmatprep.subr.bf16.mxu0 0
        %728 = vmatpush1.bf16.msra.mxu0 %v705
        %729 = vmatprep.subr.bf16.mxu0 0
        %730 = vmatpush1.bf16.msra.mxu0 %v706
        %731 = vmatprep.subr.bf16.mxu0 0
        %732 = vmatpush1.bf16.msra.mxu0 0
        %733 = vmatprep.subr.bf16.mxu0 0
        %734 = vmatpush1.bf16.msra.mxu0 0
        %735 = vmatprep.subr.bf16.mxu0 0
        %736 = vmatpush1.bf16.msra.mxu0 0
        %737 = vmatprep.subr.bf16.mxu0 0
        %738 = vmatpush1.bf16.msra.mxu0 0
        %739 = vmatprep.subr.bf16.mxu0 0
        %740 = vmatpush1.bf16.msra.mxu0 0
        %741 = vmatprep.subr.bf16.mxu0 0
        %742 = vmatpush1.bf16.msra.mxu0 0
        %743 = vmatprep.subr.bf16.mxu0 0
        %744 = vmatpush1.bf16.msra.mxu0 0
        %745 = vmatprep.subr.bf16.mxu0 0
        %746 = vmatpush1.bf16.msra.mxu0 0
        %747 = vmatprep.mubr.bf16.mxu0 0
        %748 = vmatmul.mubr.bf16.gmra.mrb[0].mxu0 %v650
        %v749 = vpop.f32.mrb[0].mxu0
        %v750 = vadd.f32 0.0, %v749
        %v751 = vpop.f32.mrb[0].mxu0
        %v752 = vpop.f32.mrb[0].mxu0
        %v753 = vpop.f32.mrb[0].mxu0
        %754 = vdwg.mxu0
        %v755 = vadd.f32 %v649, %v750
        %756 = vst [vmem:[#allocation3] sm:$0xff] %v755
        // Predicated region
        $region69: #{tpu_custom_call.1} parent=47 // pred_check
          %p757 = pneg %p402
        $region70: #{tpu_custom_call.1} parent=47 // pred_check_branch
          %759 = sbr.rel (%p757) target = $region72
        $region71: #{tpu_custom_call.1} parent=47 // pred_region
          %v760 = vld [vmem:[#allocation3] sm:$0xff]
          %v761 = vld [vmem:[%s6] sm:$0x1]
          %v763 = vlaneseq
          %v764 = vshrl.u32 %v763, 7
          %v765 = vsub.s32 0, %v764
          %v766 = vrot.slane %v761, %v765
          %v768 = vadd.f32 %v760, %v766
          %769 = vst [vmem:[%s393] sm:$0xff] %v768
        $region72: #{tpu_custom_call.1} parent=47 // pred_fallthru
          _
        %s770 = sand.u32 %s223, 1
        %s771 = scalar_lea.sflag [#allocation6], %s770
        %s772 = sand.u32 %s223, 1
        %s773 = smul.addr %s772, 8
        %s774 = scalar_lea.vmem [#allocation12], %s773
        // Predicated region
        $region73: #{tpu_custom_call.1} parent=47 // pred_check
          %p775 = pneg %p233
        $region74: #{tpu_custom_call.1} parent=47 // pred_check_branch
          %777 = sbr.rel (%p775) target = $region76
        $region75: #{tpu_custom_call.1} parent=47 // pred_region
          %s779 = ssub.s32 128, 128
          %780 = vsyncadd %s771, %s779
          %s781 = smul.addr %s30, 128
          %s782 = scalar_lea.hbm %s7, %s781
          %s784 = sshll.u32 %s774, 4
          %s785 = int_to_ptr.vmem [resolvable:$true] %s784
          %787 = dma.vmem_to_hbm [thread:$0]  %s785, 128, %s782, %s771
        $region76: #{tpu_custom_call.1} parent=47 // pred_fallthru
          _
      $region48: #{tpu_custom_call.1} parent=5 // pred_fallthru
        _
      %p788 = scmp.le.s32.totalorder 2, %s21
      // Predicated region
      $region77: #{tpu_custom_call.1} parent=5 // pred_check
        %p789 = pneg %p788
      $region78: #{tpu_custom_call.1} parent=5 // pred_check_branch
        %791 = sbr.rel (%p789) target = $region80
      $region79: #{tpu_custom_call.1} parent=5 // pred_region
        %s792 = ssub.s32 %s21, 2
        // Predicated region
        $region81: #{tpu_custom_call.1} parent=79 // pred_check
          %p793 = pneg %p239
        $region82: #{tpu_custom_call.1} parent=79 // pred_check_branch
          %795 = sbr.rel (%p793) target = $region84
        $region83: #{tpu_custom_call.1} parent=79 // pred_region
          %s796 = sand.u32 %s224, 1
          %s797 = scalar_lea.sflag [#allocation6], %s796
          %s798 = sand.u32 %s224, 1
          %s799 = smul.addr %s798, 8
          %s800 = scalar_lea.vmem [#allocation12], %s799
          %801 = dma.done %s797, 128
        $region84: #{tpu_custom_call.1} parent=79 // pred_fallthru
          _
      $region80: #{tpu_custom_call.1} parent=5 // pred_fallthru
        _
    $region6: #{tpu_custom_call.1} parent=1 // loop_footer
      %s25 = sadd.s32 1, %s21
    $region7: #{tpu_custom_call.1} parent=1 // loop_footer_branch
      %20 = sbr.rel target = $region3
    $region8: #{tpu_custom_call.1} parent=1 // loop_exit
      _
    %802 = vsyncpa [#allocation5], 1
    %s803 = scalar_lea.sflag [#allocation5], 1
    %804 = vsyncpa %s803, 1
    %805 = vsyncpa [#allocation8], 1
    %806 = vsyncpa [#allocation11], 1
    %807 = vsyncpa [#allocation6], 1
    %s808 = scalar_lea.sflag [#allocation6], 1
    %809 = vsyncpa %s808, 1

</llo_original>
